<compile_context>
chip_gen: v7x
topology: tpu7x:2x2x1
jax: 0.10.0
libtpu: 0.0.40
codegen_flags: <defaults>
</compile_context>

<pallas_src>
import functools

import jax
import jax.numpy as jnp
from jax import lax
from jax.experimental import pallas as pl
from jax.experimental.pallas import tpu as pltpu


def _round_up(a, b):
    return -(-a // b) * b


def _vq_tile_kernel(x_ref, emb_ref, neg2et_ref, esq_ref, q_ref, stats_ref, *,
                    chunk_n):
    bn, T, D = x_ref.shape
    M = emb_ref.shape[0]

    emb = emb_ref[...]          # (M, D) raw codebook (gather source, un-normalized)
    neg2et = neg2et_ref[...]    # (D, M) -2 * normalized codebook, pre-transposed
    e_sq = esq_ref[...]         # (1, M) ||e_norm||^2 per codeword

    rows = chunk_n * T
    n_chunks = bn // chunk_n
    iota_m = lax.broadcasted_iota(jnp.int32, (rows, M), 1)

    def chunk_body(c, carry):
        sse, counts = carry
        n0 = pl.multiple_of(c * chunk_n, chunk_n)
        xc = x_ref[pl.ds(n0, chunk_n), :, :].astype(jnp.float32)   # (chunk_n, T, D)

        # --- instance_norm over time (module's own: torch.std unbiased, eps on std)
        mu = jnp.mean(xc, axis=1, keepdims=True)
        xm = xc - mu
        var = jnp.sum(xm * xm, axis=1, keepdims=True) / (T - 1)
        inv_std = 1.0 / (jnp.sqrt(var) + 1e-5)       # small (chunk_n,1,D) slab only
        x_flat = (xm * inv_std).reshape(rows, D)

        # --- distances up to the row-constant ||x||^2:  ||e||^2 - 2 x.e  (MXU) ---
        dots = jnp.dot(x_flat, neg2et,
                       preferred_element_type=jnp.float32,
                       precision=lax.Precision.HIGHEST)
        dist = dots + e_sq                                          # (rows, M)

        # --- first-occurrence argmin + one-hot encodings ---
        # TODO(synk): replace with a fused jnp.argmin once its Mosaic lowering is
        # confirmed on all target generations (saves one (rows,M) reduce+select).
        min_d = jnp.min(dist, axis=-1, keepdims=True)
        idx = jnp.min(jnp.where(dist == min_d, iota_m, M), axis=-1, keepdims=True)
        onehot = (iota_m == idx).astype(jnp.float32)

        # --- quantized = F.embedding(indices, raw embedding) via MXU one-hot gather
        quant = jnp.dot(onehot, emb,
                        preferred_element_type=jnp.float32,
                        precision=lax.Precision.HIGHEST)            # (rows, D)

        diff = x_flat - quant
        sse = sse + jnp.sum(diff * diff)
        counts = counts + jnp.sum(onehot, axis=0, keepdims=True)

        # Forward value of the straight-through + averaging is exactly `quantized`.
        q_ref[pl.ds(n0, chunk_n), :, :] = (
            quant.reshape(chunk_n, T, D).astype(q_ref.dtype))
        return sse, counts

    sse, counts = lax.fori_loop(
        0, n_chunks, chunk_body,
        (jnp.zeros((), jnp.float32), jnp.zeros((1, M), jnp.float32)))

    # Single merged per-tile stats block: row 0 = codeword counts, row 1 = sq-err.
    stats_ref[:, 0:1, :] = counts[None]
    stats_ref[:, 1:2, :] = jnp.full((1, 1, M), sse, jnp.float32)
    # TODO(synk): straight-through gradient would require jax.custom_vjp; only
    # the forward value is produced.  Eval-mode codebook_usage EMA accumulation
    # is a stateful buffer update and is not part of this functional forward.


def _plan_tiling(N, T, D, M):
    """Generation-aware block_n / chunk_n / vmem_limit selection (pure Python)."""
    try:
        vmem_cap = int(pltpu.get_tpu_info().vmem_capacity_bytes)
    except Exception:
        vmem_cap = 64 * 1024 * 1024          # conservative (v7x per-core VMEM)
    vmem_limit = max(32 * 1024 * 1024,
                     min(vmem_cap * 3 // 4, 96 * 1024 * 1024))

    d_pad = _round_up(D, 128)                # lane padding for D < 128
    m_pad = _round_up(M, 128)
    t_pad = _round_up(T, 8)

    # Resident codebook blocks (raw, -2*norm^T, ||e||^2); assume double-buffered.
    cb_bytes = 2 * 4 * (_round_up(M, 8) * d_pad + _round_up(D, 8) * m_pad + 8 * m_pad)

    # Inner row-chunk: bound the (rows, M) distance / one-hot live intermediates.
    chunk_budget = 8 * 1024 * 1024
    per_row = 4 * (5 * m_pad + 4 * d_pad)
    chunk_n_max = max(1, (chunk_budget // per_row) // max(T, 1))

    # x / quantized tiles: 2 arrays x 2 buffers, lane+sublane padded.
    seq_bytes = 2 * 2 * 4 * t_pad * d_pad
    avail = vmem_limit - cb_bytes - chunk_budget - 4 * 1024 * 1024   # slack
    max_block_n = max(1, avail // seq_bytes)

    # Target >= ~2 MiB of x+quantized HBM traffic per grid step (otherwise the
    # ~0.35 us per-step overhead dominates), capped at 8192 rows.
    target_rows = min(8192, max(1024, (2 * 1024 * 1024) // (8 * D)))
    target_block_n = max(1, target_rows // T)

    divisors = [d for d in range(1, N + 1) if N % d == 0]
    feasible = [d for d in divisors if d <= max_block_n] or [1]
    two_step = [d for d in feasible if N // d >= 2]     # keep both v7x TCs busy
    pool = two_step or feasible
    at_or_below = [d for d in pool if d <= target_block_n]
    block_n = max(at_or_below) if at_or_below else min(pool)

    chunk_divs = [d for d in range(1, block_n + 1)
                  if block_n % d == 0 and d <= chunk_n_max]
    chunk_n = max(chunk_divs) if chunk_divs else 1
    return block_n, chunk_n, int(vmem_limit)


@functools.partial(jax.jit, static_argnames=("block_n", "chunk_n", "vmem_limit"))
def _vq_forward(x, embedding, *, block_n, chunk_n, vmem_limit):
    N, T, D = x.shape
    M = embedding.shape[0]
    num_blocks = N // block_n

    # One-time codebook prep (hoisted out of the per-tile body): normalized rows
    # for the distance matmul, pre-transposed to (D, M) and pre-scaled by -2 so
    # the kernel computes dist = ||e||^2 + x.(-2 e^T) with no per-tile scaling,
    # plus the per-codeword squared-norm constant.
    emb32 = embedding.astype(jnp.float32)
    emb_nrm = emb32 / (jnp.linalg.norm(emb32, axis=1, keepdims=True) + 1e-4)
    neg2_embt = (-2.0) * emb_nrm.T                        # (D, M)
    e_sq = jnp.sum(emb_nrm * emb_nrm, axis=1)[None, :]    # (1, M)

    flops = 4 * N * T * D * M                             # two MXU matmuls
    bytes_accessed = 4 * (2 * N * T * D + 2 * M * D + 2 * M + num_blocks * 2 * M)

    grid_spec = pl.GridSpec(
        grid=(num_blocks,),
        in_specs=[
            pl.BlockSpec((block_n, T, D), lambda i: (i, 0, 0)),   # x tile (pipelined)
            pl.BlockSpec((M, D), lambda i: (0, 0)),               # raw codebook (resident)
            pl.BlockSpec((D, M), lambda i: (0, 0)),               # -2 * normalized^T
            pl.BlockSpec((1, M), lambda i: (0, 0)),               # ||e||^2
        ],
        out_specs=(
            pl.BlockSpec((block_n, T, D), lambda i: (i, 0, 0)),   # quantized tile
            pl.BlockSpec((1, 2, M), lambda i: (i, 0, 0)),         # counts + sq-err
        ),
    )
    quantized, stats = pl.pallas_call(
        functools.partial(_vq_tile_kernel, chunk_n=chunk_n),
        out_shape=(jax.ShapeDtypeStruct((N, T, D), x.dtype),
                   jax.ShapeDtypeStruct((num_blocks, 2, M), jnp.float32)),
        grid_spec=grid_spec,
        compiler_params=pltpu.CompilerParams(
            dimension_semantics=("parallel",),    # no cross-tile carry
            vmem_limit_bytes=vmem_limit),
        cost_estimate=pl.CostEstimate(
            flops=flops, transcendentals=N * D, bytes_accessed=bytes_accessed),
    )(x, emb32, neg2_embt, e_sq)

    # Tiny cross-tile finalize (a scalar and an (M,) vector) in plain JAX.
    counts = jnp.sum(stats[:, 0, :], axis=0)
    sse = jnp.sum(stats[:, 1, 0])
    commitment_loss = sse / (N * T * D)
    avg_probs = counts / (N * T)
    perplexity = jnp.exp(-jnp.sum(avg_probs * jnp.log(avg_probs + 1e-10)))
    return quantized, commitment_loss, perplexity


def vq_embedding_ema_forward(x, embedding):
    """Returns (quantized_, commitment_loss, perplexity) like the PyTorch forward."""
    N, T, D = x.shape
    M, D2 = embedding.shape
    assert D == D2
    block_n, chunk_n, vmem_limit = _plan_tiling(N, T, D, M)
    return _vq_forward(x, embedding, block_n=block_n, chunk_n=chunk_n,
                       vmem_limit=vmem_limit)


def init_embedding(key, n_embeddings, embedding_dim):
    """Deterministic stand-in for the module __init__ buffer init."""
    init_bound = 1.0 / n_embeddings
    emb = jax.random.uniform(key, (n_embeddings, embedding_dim),
                             minval=-init_bound, maxval=init_bound,
                             dtype=jnp.float32)
    emb = emb / (jnp.linalg.norm(emb, axis=1, keepdims=True) + 1e-4)
    return emb


if __name__ == "__main__":
    key = jax.random.PRNGKey(0)
    k_x, k_e = jax.random.split(key)
    N, T, D, M = 2, 8, 32, 128     # batch, seq, z_dim, n_embeddings
    x = jax.random.normal(k_x, (N, T, D), dtype=jnp.float32)
    embedding = init_embedding(k_e, M, D)

    quantized, loss, perplexity = vq_embedding_ema_forward(x, embedding)
    jax.block_until_ready((quantized, loss, perplexity))
    assert quantized.shape == (N, T, D)
    assert loss.shape == () and perplexity.shape == ()
    print("KERNEL_OK")
</pallas_src>

<mosaic_0001>
module attributes {stable_mosaic.version = 11 : i64} {
  func.func @_vq_tile_kernel(%arg0: i32, %arg1: memref<1x8x32xf32, #tpu.memory_space<vmem>>, %arg2: memref<128x32xf32, #tpu.memory_space<vmem>>, %arg3: memref<32x128xf32, #tpu.memory_space<vmem>>, %arg4: memref<1x128xf32, #tpu.memory_space<vmem>>, %arg5: memref<1x8x32xf32, #tpu.memory_space<vmem>>, %arg6: memref<1x2x128xf32, #tpu.memory_space<vmem>>) attributes {dimension_semantics = [#tpu.dimension_semantics<parallel>], iteration_bounds = array<i64: 2>, scalar_prefetch = 0 : i64, scratch_operands = 0 : i64, tpu.core_type = #tpu.core_type<tc>, window_params = [{transform_indices = @transform_0, window_bounds = array<i64: 1, 8, 32>}, {pipeline_mode = #tpu.pipeline_mode<synchronous>, transform_indices = @transform_1, window_bounds = array<i64: 128, 32>}, {pipeline_mode = #tpu.pipeline_mode<synchronous>, transform_indices = @transform_2, window_bounds = array<i64: 32, 128>}, {pipeline_mode = #tpu.pipeline_mode<synchronous>, transform_indices = @transform_3, window_bounds = array<i64: 1, 128>}, {transform_indices = @transform_4, window_bounds = array<i64: 1, 8, 32>}, {transform_indices = @transform_5, window_bounds = array<i64: 1, 2, 128>}]} {
    %c0 = arith.constant 0 : index
    %c0_0 = arith.constant 0 : index
    %0 = vector.load %arg2[%c0, %c0_0] : memref<128x32xf32, #tpu.memory_space<vmem>>, vector<128x32xf32>
    %c0_1 = arith.constant 0 : index
    %c0_2 = arith.constant 0 : index
    %1 = vector.load %arg3[%c0_1, %c0_2] : memref<32x128xf32, #tpu.memory_space<vmem>>, vector<32x128xf32>
    %c0_3 = arith.constant 0 : index
    %c0_4 = arith.constant 0 : index
    %2 = vector.load %arg4[%c0_3, %c0_4] : memref<1x128xf32, #tpu.memory_space<vmem>>, vector<1x128xf32>
    %3 = tpu.iota {dimensions = array<i32: 1>} : vector<8x128xi32>
    %cst = arith.constant 0.000000e+00 : f32
    %4 = vector.broadcast %cst : f32 to vector<1x128xf32>
    %cst_5 = arith.constant 0.000000e+00 : f32
    %c0_i32 = arith.constant 0 : i32
    %c1_i32 = arith.constant 1 : i32
    %5 = arith.muli %c0_i32, %c1_i32 : i32
    %6 = tpu.assume_multiple %5, 1 : i32
    %7 = arith.index_cast %6 : i32 to index
    %c0_6 = arith.constant 0 : index
    %c0_7 = arith.constant 0 : index
    %8 = vector.load %arg1[%7, %c0_6, %c0_7] : memref<1x8x32xf32, #tpu.memory_space<vmem>>, vector<1x8x32xf32>
    %cst_8 = arith.constant dense<0.000000e+00> : vector<1x32xf32>
    %9 = vector.multi_reduction <add>, %8, %cst_8 [1] : vector<1x8x32xf32> to vector<1x32xf32>
    %10 = vector.shape_cast %9 : vector<1x32xf32> to vector<1x1x32xf32>
    %cst_9 = arith.constant 8.000000e+00 : f32
    %11 = vector.broadcast %cst_9 : f32 to vector<1x1x32xf32>
    %12 = arith.divf %10, %11 : vector<1x1x32xf32>
    %13 = vector.broadcast %12 : vector<1x1x32xf32> to vector<1x8x32xf32>
    %14 = arith.subf %8, %13 : vector<1x8x32xf32>
    %15 = arith.mulf %14, %14 : vector<1x8x32xf32>
    %cst_10 = arith.constant dense<0.000000e+00> : vector<1x32xf32>
    %16 = vector.multi_reduction <add>, %15, %cst_10 [1] : vector<1x8x32xf32> to vector<1x32xf32>
    %17 = vector.shape_cast %16 : vector<1x32xf32> to vector<1x1x32xf32>
    %cst_11 = arith.constant 7.000000e+00 : f32
    %18 = vector.broadcast %cst_11 : f32 to vector<1x1x32xf32>
    %19 = arith.divf %17, %18 : vector<1x1x32xf32>
    %20 = math.sqrt %19 : vector<1x1x32xf32>
    %cst_12 = arith.constant 9.99999974E-6 : f32
    %21 = vector.broadcast %cst_12 : f32 to vector<1x1x32xf32>
    %22 = arith.addf %20, %21 : vector<1x1x32xf32>
    %cst_13 = arith.constant 1.000000e+00 : f32
    %23 = vector.broadcast %cst_13 : f32 to vector<1x1x32xf32>
    %24 = arith.divf %23, %22 : vector<1x1x32xf32>
    %25 = vector.broadcast %24 : vector<1x1x32xf32> to vector<1x8x32xf32>
    %26 = arith.mulf %14, %25 : vector<1x8x32xf32>
    %27 = vector.shape_cast %26 : vector<1x8x32xf32> to vector<8x32xf32>
    %cst_14 = arith.constant dense<0.000000e+00> : vector<8x128xf32>
    %28 = tpu.matmul %27, %1, %cst_14 {dimension_numbers = #tpu.dot_dimension_numbers<[1], [0], [0], [1], [0, 0, 1, 1], [], []>, precision = #tpu.contract_precision<fp32>} : vector<8x32xf32>, vector<32x128xf32>, vector<8x128xf32> -> vector<8x128xf32>
    %29 = vector.broadcast %2 : vector<1x128xf32> to vector<8x128xf32>
    %30 = arith.addf %28, %29 : vector<8x128xf32>
    %cst_15 = arith.constant dense<0x7F800000> : vector<8xf32>
    %31 = vector.multi_reduction <minimumf>, %30, %cst_15 [1] : vector<8x128xf32> to vector<8xf32>
    %32 = vector.shape_cast %31 : vector<8xf32> to vector<8x1xf32>
    %33 = vector.broadcast %32 : vector<8x1xf32> to vector<8x128xf32>
    %34 = arith.cmpf oeq, %30, %33 : vector<8x128xf32>
    %c128_i32 = arith.constant 128 : i32
    %35 = vector.broadcast %c128_i32 : i32 to vector<8x128xi32>
    %36 = arith.select %34, %3, %35 : vector<8x128xi1>, vector<8x128xi32>
    %cst_16 = arith.constant dense<2147483647> : vector<8xi32>
    %37 = vector.multi_reduction <minsi>, %36, %cst_16 [1] : vector<8x128xi32> to vector<8xi32>
    %38 = vector.shape_cast %37 : vector<8xi32> to vector<8x1xi32>
    %39 = vector.broadcast %38 : vector<8x1xi32> to vector<8x128xi32>
    %40 = arith.cmpi eq, %3, %39 : vector<8x128xi32>
    %41 = arith.extui %40 : vector<8x128xi1> to vector<8x128xi32>
    %42 = arith.sitofp %41 : vector<8x128xi32> to vector<8x128xf32>
    %cst_17 = arith.constant dense<0.000000e+00> : vector<8x32xf32>
    %43 = tpu.matmul %42, %0, %cst_17 {dimension_numbers = #tpu.dot_dimension_numbers<[1], [0], [0], [1], [0, 0, 1, 1], [], []>, precision = #tpu.contract_precision<fp32>} : vector<8x128xf32>, vector<128x32xf32>, vector<8x32xf32> -> vector<8x32xf32>
    %44 = arith.subf %27, %43 : vector<8x32xf32>
    %45 = arith.mulf %44, %44 : vector<8x32xf32>
    %46 = vector.shape_cast %45 : vector<8x32xf32> to vector<1x8x32xf32>
    %cst_18 = arith.constant dense<0.000000e+00> : vector<1xf32>
    %47 = vector.multi_reduction <add>, %46, %cst_18 [1, 2] : vector<1x8x32xf32> to vector<1xf32>
    %48 = vector.shape_cast %47 : vector<1xf32> to vector<1x1x1xf32>
    %49 = vector.extract %48[0, 0, 0] : f32 from vector<1x1x1xf32>
    %50 = arith.addf %cst_5, %49 : f32
    %cst_19 = arith.constant dense<0.000000e+00> : vector<128xf32>
    %51 = vector.multi_reduction <add>, %42, %cst_19 [0] : vector<8x128xf32> to vector<128xf32>
    %52 = vector.shape_cast %51 : vector<128xf32> to vector<1x128xf32>
    %53 = arith.addf %4, %52 : vector<1x128xf32>
    %54 = vector.shape_cast %43 : vector<8x32xf32> to vector<1x8x32xf32>
    %55 = arith.index_cast %6 : i32 to index
    %c0_20 = arith.constant 0 : index
    %c0_21 = arith.constant 0 : index
    %56 = vector.load %arg5[%55, %c0_20, %c0_21] : memref<1x8x32xf32, #tpu.memory_space<vmem>>, vector<1x8x32xf32>
    tpu.vector_store %arg5[%55, %c0_20, %c0_21], %54 {strides = array<i32>} : memref<1x8x32xf32, #tpu.memory_space<vmem>>, vector<1x8x32xf32>,
    %c1_i32_22 = arith.constant 1 : i32
    %57 = vector.shape_cast %53 : vector<1x128xf32> to vector<1x1x128xf32>
    %c0_23 = arith.constant 0 : index
    %c0_24 = arith.constant 0 : index
    %c0_25 = arith.constant 0 : index
    %58 = vector.load %arg6[%c0_23, %c0_24, %c0_25] : memref<1x2x128xf32, #tpu.memory_space<vmem>>, vector<1x1x128xf32>
    tpu.vector_store %arg6[%c0_23, %c0_24, %c0_25], %57 {strides = array<i32>} : memref<1x2x128xf32, #tpu.memory_space<vmem>>, vector<1x1x128xf32>,
    %59 = vector.broadcast %50 : f32 to vector<1x1x128xf32>
    %c0_26 = arith.constant 0 : index
    %c1 = arith.constant 1 : index
    %c0_27 = arith.constant 0 : index
    %60 = vector.load %arg6[%c0_26, %c1, %c0_27] : memref<1x2x128xf32, #tpu.memory_space<vmem>>, vector<1x1x128xf32>
    tpu.vector_store %arg6[%c0_26, %c1, %c0_27], %59 {strides = array<i32>} : memref<1x2x128xf32, #tpu.memory_space<vmem>>, vector<1x1x128xf32>,
    return
  }
  func.func @transform_0(%arg0: i32) -> (i32, i32, i32) {
    %c0_i32 = arith.constant 0 : i32
    %c0_i32_0 = arith.constant 0 : i32
    %c0_i32_1 = arith.constant 0 : i32
    return %arg0, %c0_i32, %c0_i32_0 : i32, i32, i32
  }
  func.func @transform_1(%arg0: i32) -> (i32, i32) {
    %c0_i32 = arith.constant 0 : i32
    %c0_i32_0 = arith.constant 0 : i32
    %c0_i32_1 = arith.constant 0 : i32
    return %c0_i32, %c0_i32_0 : i32, i32
  }
  func.func @transform_2(%arg0: i32) -> (i32, i32) {
    %c0_i32 = arith.constant 0 : i32
    %c0_i32_0 = arith.constant 0 : i32
    %c0_i32_1 = arith.constant 0 : i32
    return %c0_i32, %c0_i32_0 : i32, i32
  }
  func.func @transform_3(%arg0: i32) -> (i32, i32) {
    %c0_i32 = arith.constant 0 : i32
    %c0_i32_0 = arith.constant 0 : i32
    %c0_i32_1 = arith.constant 0 : i32
    return %c0_i32, %c0_i32_0 : i32, i32
  }
  func.func @transform_4(%arg0: i32) -> (i32, i32, i32) {
    %c0_i32 = arith.constant 0 : i32
    %c0_i32_0 = arith.constant 0 : i32
    %c0_i32_1 = arith.constant 0 : i32
    return %arg0, %c0_i32, %c0_i32_0 : i32, i32, i32
  }
  func.func @transform_5(%arg0: i32) -> (i32, i32, i32) {
    %c0_i32 = arith.constant 0 : i32
    %c0_i32_0 = arith.constant 0 : i32
    %c0_i32_1 = arith.constant 0 : i32
    return %arg0, %c0_i32, %c0_i32_0 : i32, i32, i32
  }
}

</mosaic_0001>

<llo_original>
// kernel: _vq_forward.1
$region0: #{_vq_forward.1}
  #allocation0 [shape = 'u32[]', space=smem, size = 0x4, offset = 0x4, fixed_abs, tag = 'smem constant byte address 0x4 - core index']
  #allocation1 [shape = 'u32[144,128]{1,0:T(1,128)}', space=vmem, size = 0x12000, scoped, tag = 'internal scratch']
  %s0 = inlined_call_operand.vmem [shape: f32[2,8,32], index: 0, kind: input, shape index: {}]
  %s1 = inlined_call_operand.vmem [shape: f32[128,32], index: 1, kind: input, shape index: {}]
  %s2 = inlined_call_operand.vmem [shape: f32[32,128], index: 2, kind: input, shape index: {}]
  %s3 = inlined_call_operand.vmem [shape: f32[1,128], index: 3, kind: input, shape index: {}]
  %s4 = inlined_call_operand.hbm [shape: f32[2,8,32], index: 4, kind: output, shape index: {0}]
  %s5 = inlined_call_operand.vmem [shape: f32[2,2,128], index: 5, kind: output, shape index: {1}]
  %6 = xla_tuple %s4, %s5
  %s7 = sld [smem:[#allocation0]]
  $region57: #{_vq_forward.1} parent=0
    _
  %s9 = ssub.s32 1, %s7
  %s10 = scalar_select 0, %s9, %s7
  $region1: #{_vq_forward.1} parent=0
    #allocation2 [shape = 'u8[8192]{0}', space=vmem, size = 0x2000, scoped, tag = 'output window, operand 0']
    #allocation3 [shape = 's32[2]{0}', space=sflag, size = 0x8, scoped, tag = 'scoped memory for _vq_forward.1']
    %11 = vsyncpa [#allocation3], 0
    %s12 = scalar_lea.sflag [#allocation3], 1
    %13 = vsyncpa %s12, 0
    loop: start=0, step=1, limit=4
    $region2: #{_vq_forward.1} parent=1 // loop_pre_header
      _
    $region3: #{_vq_forward.1} parent=1 // loop_header
      %s15 = sphi 0, %s19
      %p16 = scmp.ge.s32.totalorder %s15, 4
      %s25 = sphi 0, %s27
      %s28 = sphi 0, %s25
      %s29 = sphi 0, %s28
      %s45 = sphi 0, %s29
      %s49 = sphi 0, %s49
      %s51 = sphi 0, %s49
      %s52 = sphi 0, %s51
      %s66 = sphi 0, %s52
      %s70 = sphi 0, %s70
      %s72 = sphi 0, %s70
      %s73 = sphi 0, %s72
      %s87 = sphi 0, %s73
      %s91 = sphi 0, %s91
      %s93 = sphi 0, %s91
      %s94 = sphi 0, %s93
      %s108 = sphi 0, %s94
      %s114 = sphi 0, %s116
      %s117 = sphi 0, %s114
      %s118 = sphi 0, %s117
      %s134 = sphi 0, %s118
      %s140 = sphi 0, %s142
      %s143 = sphi 0, %s140
      %s144 = sphi 0, %s143
      %s160 = sphi 0, %s144
    $region4: #{_vq_forward.1} parent=1 // loop_header_branch
      %18 = sbr.rel (%p16) target = $region8
    $region5: #{_vq_forward.1} parent=1 // loop_body
      %s20 = ssub.s32 %s15, 1
      %s21 = ssub.s32 %s15, 2
      %s22 = sadd.s32 %s15, 1
      %s23 = ssub.s32 %s15, %s22
      %p24 = scmp.eq.s32.totalorder %s23, 0
      %s26 = sadd.s32 %s25, 1
      %s27 = scalar_select %p24, %s25, %s26
      %p30 = pneg %p24
      %p31 = scmp.eq.s32.totalorder %s15, 1
      %p32 = por %p30, %p31
      %p33 = scmp.ne.s32.totalorder %s25, %s28
      %p34 = scmp.eq.s32.totalorder %s15, 0
      %p35 = por %p33, %p34
      %p36 = scmp.ne.s32.totalorder %s25, %s28
      %p37 = scmp.eq.s32.totalorder %s20, 1
      %p38 = por %p36, %p37
      %p39 = scmp.ne.s32.totalorder %s28, %s29
      %p40 = scmp.eq.s32.totalorder %s20, 0
      %p41 = por %p39, %p40
      %p42 = scmp.ne.s32.totalorder %s28, %s29
      %p43 = scmp.eq.s32.totalorder %s21, 1
      %p44 = por %p42, %p43
      %p46 = scmp.ne.s32.totalorder %s29, %s45
      %p47 = scmp.eq.s32.totalorder %s21, 0
      %p48 = por %p46, %p47
      %s50 = sadd.s32 %s49, 1
      %p53 = scmp.eq.s32.totalorder %s15, 1
      %p54 = scmp.ne.s32.totalorder %s49, %s51
      %p55 = scmp.eq.s32.totalorder %s15, 0
      %p56 = por %p54, %p55
      %p57 = scmp.ne.s32.totalorder %s49, %s51
      %p58 = scmp.eq.s32.totalorder %s20, 1
      %p59 = por %p57, %p58
      %p60 = scmp.ne.s32.totalorder %s51, %s52
      %p61 = scmp.eq.s32.totalorder %s20, 0
      %p62 = por %p60, %p61
      %p63 = scmp.ne.s32.totalorder %s51, %s52
      %p64 = scmp.eq.s32.totalorder %s21, 1
      %p65 = por %p63, %p64
      %p67 = scmp.ne.s32.totalorder %s52, %s66
      %p68 = scmp.eq.s32.totalorder %s21, 0
      %p69 = por %p67, %p68
      %s71 = sadd.s32 %s70, 1
      %p74 = scmp.eq.s32.totalorder %s15, 1
      %p75 = scmp.ne.s32.totalorder %s70, %s72
      %p76 = scmp.eq.s32.totalorder %s15, 0
      %p77 = por %p75, %p76
      %p78 = scmp.ne.s32.totalorder %s70, %s72
      %p79 = scmp.eq.s32.totalorder %s20, 1
      %p80 = por %p78, %p79
      %p81 = scmp.ne.s32.totalorder %s72, %s73
      %p82 = scmp.eq.s32.totalorder %s20, 0
      %p83 = por %p81, %p82
      %p84 = scmp.ne.s32.totalorder %s72, %s73
      %p85 = scmp.eq.s32.totalorder %s21, 1
      %p86 = por %p84, %p85
      %p88 = scmp.ne.s32.totalorder %s73, %s87
      %p89 = scmp.eq.s32.totalorder %s21, 0
      %p90 = por %p88, %p89
      %s92 = sadd.s32 %s91, 1
      %p95 = scmp.eq.s32.totalorder %s15, 1
      %p96 = scmp.ne.s32.totalorder %s91, %s93
      %p97 = scmp.eq.s32.totalorder %s15, 0
      %p98 = por %p96, %p97
      %p99 = scmp.ne.s32.totalorder %s91, %s93
      %p100 = scmp.eq.s32.totalorder %s20, 1
      %p101 = por %p99, %p100
      %p102 = scmp.ne.s32.totalorder %s93, %s94
      %p103 = scmp.eq.s32.totalorder %s20, 0
      %p104 = por %p102, %p103
      %p105 = scmp.ne.s32.totalorder %s93, %s94
      %p106 = scmp.eq.s32.totalorder %s21, 1
      %p107 = por %p105, %p106
      %p109 = scmp.ne.s32.totalorder %s94, %s108
      %p110 = scmp.eq.s32.totalorder %s21, 0
      %p111 = por %p109, %p110
      %s112 = ssub.s32 %s15, %s22
      %p113 = scmp.eq.s32.totalorder %s112, 0
      %s115 = sadd.s32 %s114, 1
      %s116 = scalar_select %p113, %s114, %s115
      %p119 = pneg %p113
      %p120 = scmp.eq.s32.totalorder %s15, 1
      %p121 = por %p119, %p120
      %p122 = scmp.ne.s32.totalorder %s114, %s117
      %p123 = scmp.eq.s32.totalorder %s15, 0
      %p124 = por %p122, %p123
      %p125 = scmp.ne.s32.totalorder %s114, %s117
      %p126 = scmp.eq.s32.totalorder %s20, 1
      %p127 = por %p125, %p126
      %p128 = scmp.ne.s32.totalorder %s117, %s118
      %p129 = scmp.eq.s32.totalorder %s20, 0
      %p130 = por %p128, %p129
      %p131 = scmp.ne.s32.totalorder %s117, %s118
      %p132 = scmp.eq.s32.totalorder %s21, 1
      %p133 = por %p131, %p132
      %p135 = scmp.ne.s32.totalorder %s118, %s134
      %p136 = scmp.eq.s32.totalorder %s21, 0
      %p137 = por %p135, %p136
      %s138 = ssub.s32 %s15, %s22
      %p139 = scmp.eq.s32.totalorder %s138, 0
      %s141 = sadd.s32 %s140, 1
      %s142 = scalar_select %p139, %s140, %s141
      %p145 = pneg %p139
      %p146 = scmp.eq.s32.totalorder %s15, 1
      %p147 = por %p145, %p146
      %p148 = scmp.ne.s32.totalorder %s140, %s143
      %p149 = scmp.eq.s32.totalorder %s15, 0
      %p150 = por %p148, %p149
      %p151 = scmp.ne.s32.totalorder %s140, %s143
      %p152 = scmp.eq.s32.totalorder %s20, 1
      %p153 = por %p151, %p152
      %p154 = scmp.ne.s32.totalorder %s143, %s144
      %p155 = scmp.eq.s32.totalorder %s20, 0
      %p156 = por %p154, %p155
      %p157 = scmp.ne.s32.totalorder %s143, %s144
      %p158 = scmp.eq.s32.totalorder %s21, 1
      %p159 = por %p157, %p158
      %p161 = scmp.ne.s32.totalorder %s144, %s160
      %p162 = scmp.eq.s32.totalorder %s21, 0
      %p163 = por %p161, %p162
      %p164 = scmp.le.s32.totalorder 1, %s15
      %p165 = scmp.lt.s32.totalorder %s15, 3
      %p166 = pnand %p164, %p165
      %p167 = pneg %p166
      // Predicated region
      $region9: #{_vq_forward.1} parent=5 // pred_check
        _
      $region10: #{_vq_forward.1} parent=5 // pred_check_branch
        %169 = sbr.rel (%p166) target = $region12
      $region11: #{_vq_forward.1} parent=5 // pred_region
        %s170 = ssub.s32 %s15, 1
        // Predicated region
        $region13: #{_vq_forward.1} parent=11 // pred_check
          %p171 = pneg %p62
        $region14: #{_vq_forward.1} parent=11 // pred_check_branch
          %173 = sbr.rel (%p171) target = $region16
        $region15: #{_vq_forward.1} parent=11 // pred_region
          _
        $region16: #{_vq_forward.1} parent=11 // pred_fallthru
          _
        // Predicated region
        $region17: #{_vq_forward.1} parent=11 // pred_check
          %p174 = pneg %p83
        $region18: #{_vq_forward.1} parent=11 // pred_check_branch
          %176 = sbr.rel (%p174) target = $region20
        $region19: #{_vq_forward.1} parent=11 // pred_region
          _
        $region20: #{_vq_forward.1} parent=11 // pred_fallthru
          _
        // Predicated region
        $region21: #{_vq_forward.1} parent=11 // pred_check
          %p177 = pneg %p104
        $region22: #{_vq_forward.1} parent=11 // pred_check_branch
          %179 = sbr.rel (%p177) target = $region24
        $region23: #{_vq_forward.1} parent=11 // pred_region
          _
        $region24: #{_vq_forward.1} parent=11 // pred_fallthru
          _
      $region12: #{_vq_forward.1} parent=5 // pred_fallthru
        _
      %p180 = scmp.lt.s32.totalorder %s15, 2
      // Predicated region
      $region25: #{_vq_forward.1} parent=5 // pred_check
        %p181 = pneg %p180
      $region26: #{_vq_forward.1} parent=5 // pred_check_branch
        %183 = sbr.rel (%p181) target = $region28
      $region27: #{_vq_forward.1} parent=5 // pred_region
        // Predicated region
        $region29: #{_vq_forward.1} parent=27 // pred_check
          %p184 = pneg %p35
        $region30: #{_vq_forward.1} parent=27 // pred_check_branch
          %186 = sbr.rel (%p184) target = $region32
        $region31: #{_vq_forward.1} parent=27 // pred_region
          %p187 = scmp.lt.s32.totalorder %s15, 1
          %s188 = scalar_select %p187, %s15, 1
          %s189 = smul.addr %s188, 8
          %s190 = scalar_lea.vmem %s0, %s189
        $region32: #{_vq_forward.1} parent=27 // pred_fallthru
          _
      $region28: #{_vq_forward.1} parent=5 // pred_fallthru
        _
      %p191 = scmp.le.s32.totalorder 1, %s15
      %p192 = scmp.lt.s32.totalorder %s15, 3
      %p193 = pnand %p191, %p192
      %p194 = pneg %p193
      // Predicated region
      $region33: #{_vq_forward.1} parent=5 // pred_check
        _
      $region34: #{_vq_forward.1} parent=5 // pred_check_branch
        %196 = sbr.rel (%p193) target = $region36
      $region35: #{_vq_forward.1} parent=5 // pred_region
        %s197 = ssub.s32 %s15, 1
        %p198 = scmp.lt.s32.totalorder %s20, 1
        %s199 = scalar_select %p198, %s20, 1
        %s200 = smul.addr %s199, 8
        %s201 = scalar_lea.vmem %s0, %s200
        %p202 = pneg %p41
        %p203 = pneg %p38
        %p204 = pneg %p62
        %p205 = pneg %p59
        %p206 = pneg %p83
        %p207 = pneg %p80
        %p208 = pneg %p104
        %p209 = pneg %p101
        %p210 = pneg %p130
        %p211 = pneg %p127
        %s212 = sand.u32 %s117, 1
        %s213 = scalar_lea.sflag [#allocation3], %s212
        %s214 = sand.u32 %s117, 1
        %s215 = smul.addr %s214, 8
        %s216 = scalar_lea.vmem [#allocation2], %s215
        %p217 = pneg %p156
        %p218 = pneg %p153
        %p219 = scmp.lt.s32.totalorder %s20, 1
        %s220 = scalar_select %p219, %s20, 1
        %s221 = smul.addr %s220, 2
        %s222 = scalar_lea.vmem %s5, %s221
        %p223 = scmp.lt.s32.totalorder %s20, 1
        %s224 = scalar_select %p223, %s20, 1
        %s225 = smul.addr %s224, 8
        %s226 = scalar_lea.vmem %s0, %s225
        %p227 = scmp.lt.s32.totalorder %s20, 1
        %s228 = scalar_select %p227, %s20, 1
        %s229 = smul.addr %s228, 2
        %s230 = scalar_lea.vmem %s5, %s229
        %v231 = vld [vmem:[%s1] sm:$0xff]
        %v232 = vld [vmem:[%s1 + $0x8] sm:$0xff]
        %v233 = vld [vmem:[%s1 + $0x10] sm:$0xff]
        %v234 = vld [vmem:[%s1 + $0x18] sm:$0xff]
        %v235 = vld [vmem:[%s1 + $0x20] sm:$0xff]
        %v236 = vld [vmem:[%s1 + $0x28] sm:$0xff]
        %v237 = vld [vmem:[%s1 + $0x30] sm:$0xff]
        %v238 = vld [vmem:[%s1 + $0x38] sm:$0xff]
        %v239 = vld [vmem:[%s1 + $0x40] sm:$0xff]
        %v240 = vld [vmem:[%s1 + $0x48] sm:$0xff]
        %v241 = vld [vmem:[%s1 + $0x50] sm:$0xff]
        %v242 = vld [vmem:[%s1 + $0x58] sm:$0xff]
        %v243 = vld [vmem:[%s1 + $0x60] sm:$0xff]
        %v244 = vld [vmem:[%s1 + $0x68] sm:$0xff]
        %v245 = vld [vmem:[%s1 + $0x70] sm:$0xff]
        %v246 = vld [vmem:[%s1 + $0x78] sm:$0xff]
        %v247 = vld [vmem:[%s2] sm:$0xff]
        %v248 = vld [vmem:[%s2 + $0x8] sm:$0xff]
        %v249 = vld [vmem:[%s2 + $0x10] sm:$0xff]
        %v250 = vld [vmem:[%s2 + $0x18] sm:$0xff]
        %v251 = vld [vmem:[%s3] sm:$0x1]
        %v252 = vlaneseq
        %v253 = vand.u32 %v252, 127
        %s254 = smul.u32 0, 8
        %s255 = scalar_lea.vmem %s226, %s254
        %v256 = vld [vmem:[%s255] sm:$0xff]
        %vm257 = vcmask 261120
        %v258 = vsel %vm257, %v256, 0.0
        %v259 = vrot.slane %v258, 4
        %v260 = vadd.f32 %v258, %v259
        %v261 = vrot.slane %v260, 2
        %v262 = vadd.f32 %v260, %v261
        %v263 = vrot.slane %v262, 1
        %v264 = vadd.f32 %v262, %v263
        %v265 = vrcp.pop 8.0
        %v266 = vmul.f32 %v264, %v265
        %v267 = vsub.f32 %v256, %v266
        %v268 = vmul.f32 %v267, %v267
        %v269 = vsel %vm257, %v268, 0.0
        %v270 = vrot.slane %v269, 4
        %v271 = vadd.f32 %v269, %v270
        %v272 = vrot.slane %v271, 2
        %v273 = vadd.f32 %v271, %v272
        %v274 = vrot.slane %v273, 1
        %v275 = vadd.f32 %v273, %v274
        %v276 = vrcp.pop 7.0
        %v277 = vmul.f32 %v275, %v276
        %v278 = vrsqrt.pop %v277
        %v279 = vmul.f32 %v277, %v278
        %vm280 = vcmp.eq.f32.partialorder %v277, inf
        %v281 = vsel %vm280, %v277, %v279
        %vm282 = vcmp.eq.f32.partialorder %v277, 0.0
        %v283 = vand.u32 %v277, 2147483648
        %v284 = vsel %vm282, %v283, %v281
        %v285 = vadd.f32 %v284, 1e-05
        %v286 = vrcp.pop %v285
        %v287 = vmul.f32 1.0, %v286
        %v288 = vmul.f32 %v267, %v287
        %v290 = vlaneseq
        %v291 = vshrl.u32 %v290, 7
        %v292 = vsub.s32 0, %v291
        %v293 = vrot.slane %v251, %v292
        %v296 = vsel %vm257, %v288, 0
        %298 = vmatprep.subr.mxu0 0.0
        %v299 = vand.u32 %v247, 4294901760
        %300 = vmatpush1.msra.mxu0 %v299
        %301 = vmatprep.subr.mxu0 0.0
        %v302 = vand.u32 %v248, 4294901760
        %303 = vmatpush1.msra.mxu0 %v302
        %304 = vmatprep.subr.mxu0 0.0
        %v305 = vand.u32 %v249, 4294901760
        %306 = vmatpush1.msra.mxu0 %v305
        %307 = vmatprep.subr.mxu0 0.0
        %v308 = vand.u32 %v250, 4294901760
        %309 = vmatpush1.msra.mxu0 %v308
        %310 = vmatprep.subr.mxu0 0.0
        %311 = vmatpush1.msra.mxu0 0.0
        %312 = vmatprep.subr.mxu0 0.0
        %313 = vmatpush1.msra.mxu0 0.0
        %314 = vmatprep.subr.mxu0 0.0
        %315 = vmatpush1.msra.mxu0 0.0
        %316 = vmatprep.subr.mxu0 0.0
        %317 = vmatpush1.msra.mxu0 0.0
        %318 = vmatprep.subr.mxu0 0.0
        %319 = vmatpush1.msra.mxu0 0.0
        %320 = vmatprep.subr.mxu0 0.0
        %321 = vmatpush1.msra.mxu0 0.0
        %322 = vmatprep.subr.mxu0 0.0
        %323 = vmatpush1.msra.mxu0 0.0
        %324 = vmatprep.subr.mxu0 0.0
        %325 = vmatpush1.msra.mxu0 0.0
        %326 = vmatprep.subr.mxu0 0.0
        %327 = vmatpush1.msra.mxu0 0.0
        %328 = vmatprep.subr.mxu0 0.0
        %329 = vmatpush1.msra.mxu0 0.0
        %330 = vmatprep.subr.mxu0 0.0
        %331 = vmatpush1.msra.mxu0 0.0
        %332 = vmatprep.subr.mxu0 0.0
        %333 = vmatpush1.msra.mxu0 0.0
        %334 = vmatprep.subr.mxu0 0.0
        %335 = vmatpush1.msra.mxu0 0.0
        %336 = vmatprep.subr.mxu0 0.0
        %337 = vmatpush1.msra.mxu0 0.0
        %338 = vmatprep.subr.mxu0 0.0
        %339 = vmatpush1.msra.mxu0 0.0
        %340 = vmatprep.subr.mxu0 0.0
        %341 = vmatpush1.msra.mxu0 0.0
        %342 = vmatprep.subr.mxu0 0.0
        %343 = vmatpush1.msra.mxu0 0.0
        %344 = vmatprep.subr.mxu0 0.0
        %345 = vmatpush1.msra.mxu0 0.0
        %346 = vmatprep.subr.mxu0 0.0
        %347 = vmatpush1.msra.mxu0 0.0
        %348 = vmatprep.subr.mxu0 0.0
        %349 = vmatpush1.msra.mxu0 0.0
        %350 = vmatprep.subr.mxu0 0.0
        %351 = vmatpush1.msra.mxu0 0.0
        %352 = vmatprep.subr.mxu0 0.0
        %353 = vmatpush1.msra.mxu0 0.0
        %354 = vmatprep.subr.mxu0 0.0
        %355 = vmatpush1.msra.mxu0 0.0
        %356 = vmatprep.subr.mxu0 0.0
        %357 = vmatpush1.msra.mxu0 0.0
        %358 = vmatprep.subr.mxu0 0.0
        %359 = vmatpush1.msra.mxu0 0.0
        %360 = vmatprep.subr.mxu0 0.0
        %361 = vmatpush1.msra.mxu0 0.0
        %362 = vmatprep.subr.mxu0 0.0
        %363 = vmatpush1.msra.mxu0 0.0
        %364 = vmatprep.subr.mxu0 0.0
        %365 = vmatpush1.msra.mxu0 0.0
        %366 = vmatprep.mubr.f32.mxu0 0.0
        %v367 = vand.u32 %v296, 4294901760
        %v368 = vsub.f32 %v296, %v367
        %v369 = vand.u32 %v368, 4294901760
        %v370 = vsub.f32 %v368, %v369
        %v371 = vand.u32 %v370, 4294901760
        %372 = vmatmul.mubr.f32.gmra.mrb[0].mxu0 %v371
        %v373 = vpop.f32.mrb[0].mxu0
        %v374 = vadd.f32 %v293, %v373
        %v375 = vpop.f32.mrb[0].mxu0
        %376 = vdwg.mxu0
        %377 = vmatprep.subr.mxu0 0.0
        %v378 = vand.u32 %v247, 4294901760
        %v379 = vsub.f32 %v247, %v378
        %v380 = vand.u32 %v379, 4294901760
        %v381 = vsub.f32 %v379, %v380
        %v382 = vand.u32 %v381, 4294901760
        %383 = vmatpush1.msra.mxu0 %v382
        %384 = vmatprep.subr.mxu0 0.0
        %v385 = vand.u32 %v248, 4294901760
        %v386 = vsub.f32 %v248, %v385
        %v387 = vand.u32 %v386, 4294901760
        %v388 = vsub.f32 %v386, %v387
        %v389 = vand.u32 %v388, 4294901760
        %390 = vmatpush1.msra.mxu0 %v389
        %391 = vmatprep.subr.mxu0 0.0
        %v392 = vand.u32 %v249, 4294901760
        %v393 = vsub.f32 %v249, %v392
        %v394 = vand.u32 %v393, 4294901760
        %v395 = vsub.f32 %v393, %v394
        %v396 = vand.u32 %v395, 4294901760
        %397 = vmatpush1.msra.mxu0 %v396
        %398 = vmatprep.subr.mxu0 0.0
        %v399 = vand.u32 %v250, 4294901760
        %v400 = vsub.f32 %v250, %v399
        %v401 = vand.u32 %v400, 4294901760
        %v402 = vsub.f32 %v400, %v401
        %v403 = vand.u32 %v402, 4294901760
        %404 = vmatpush1.msra.mxu0 %v403
        %405 = vmatprep.subr.mxu0 0.0
        %406 = vmatpush1.msra.mxu0 0.0
        %407 = vmatprep.subr.mxu0 0.0
        %408 = vmatpush1.msra.mxu0 0.0
        %409 = vmatprep.subr.mxu0 0.0
        %410 = vmatpush1.msra.mxu0 0.0
        %411 = vmatprep.subr.mxu0 0.0
        %412 = vmatpush1.msra.mxu0 0.0
        %413 = vmatprep.subr.mxu0 0.0
        %414 = vmatpush1.msra.mxu0 0.0
        %415 = vmatprep.subr.mxu0 0.0
        %416 = vmatpush1.msra.mxu0 0.0
        %417 = vmatprep.subr.mxu0 0.0
        %418 = vmatpush1.msra.mxu0 0.0
        %419 = vmatprep.subr.mxu0 0.0
        %420 = vmatpush1.msra.mxu0 0.0
        %421 = vmatprep.subr.mxu0 0.0
        %422 = vmatpush1.msra.mxu0 0.0
        %423 = vmatprep.subr.mxu0 0.0
        %424 = vmatpush1.msra.mxu0 0.0
        %425 = vmatprep.subr.mxu0 0.0
        %426 = vmatpush1.msra.mxu0 0.0
        %427 = vmatprep.subr.mxu0 0.0
        %428 = vmatpush1.msra.mxu0 0.0
        %429 = vmatprep.subr.mxu0 0.0
        %430 = vmatpush1.msra.mxu0 0.0
        %431 = vmatprep.subr.mxu0 0.0
        %432 = vmatpush1.msra.mxu0 0.0
        %433 = vmatprep.subr.mxu0 0.0
        %434 = vmatpush1.msra.mxu0 0.0
        %435 = vmatprep.subr.mxu0 0.0
        %436 = vmatpush1.msra.mxu0 0.0
        %437 = vmatprep.subr.mxu0 0.0
        %438 = vmatpush1.msra.mxu0 0.0
        %439 = vmatprep.subr.mxu0 0.0
        %440 = vmatpush1.msra.mxu0 0.0
        %441 = vmatprep.subr.mxu0 0.0
        %442 = vmatpush1.msra.mxu0 0.0
        %443 = vmatprep.subr.mxu0 0.0
        %444 = vmatpush1.msra.mxu0 0.0
        %445 = vmatprep.subr.mxu0 0.0
        %446 = vmatpush1.msra.mxu0 0.0
        %447 = vmatprep.subr.mxu0 0.0
        %448 = vmatpush1.msra.mxu0 0.0
        %449 = vmatprep.subr.mxu0 0.0
        %450 = vmatpush1.msra.mxu0 0.0
        %451 = vmatprep.subr.mxu0 0.0
        %452 = vmatpush1.msra.mxu0 0.0
        %453 = vmatprep.subr.mxu0 0.0
        %454 = vmatpush1.msra.mxu0 0.0
        %455 = vmatprep.subr.mxu0 0.0
        %456 = vmatpush1.msra.mxu0 0.0
        %457 = vmatprep.subr.mxu0 0.0
        %458 = vmatpush1.msra.mxu0 0.0
        %459 = vmatprep.subr.mxu0 0.0
        %460 = vmatpush1.msra.mxu0 0.0
        %461 = vmatprep.mubr.f32.mxu0 0.0
        %v462 = vand.u32 %v296, 4294901760
        %463 = vmatmul.mubr.f32.gmra.mrb[0].mxu0 %v462
        %v464 = vpop.f32.mrb[0].mxu0
        %v465 = vadd.f32 %v374, %v464
        %v466 = vpop.f32.mrb[0].mxu0
        %467 = vdwg.mxu0
        %468 = vmatprep.subr.mxu0 0.0
        %v469 = vand.u32 %v247, 4294901760
        %v470 = vsub.f32 %v247, %v469
        %471 = vmatpush1.msra.mxu0 %v470
        %472 = vmatprep.subr.mxu0 0.0
        %v473 = vand.u32 %v248, 4294901760
        %v474 = vsub.f32 %v248, %v473
        %475 = vmatpush1.msra.mxu0 %v474
        %476 = vmatprep.subr.mxu0 0.0
        %v477 = vand.u32 %v249, 4294901760
        %v478 = vsub.f32 %v249, %v477
        %479 = vmatpush1.msra.mxu0 %v478
        %480 = vmatprep.subr.mxu0 0.0
        %v481 = vand.u32 %v250, 4294901760
        %v482 = vsub.f32 %v250, %v481
        %483 = vmatpush1.msra.mxu0 %v482
        %484 = vmatprep.subr.mxu0 0.0
        %485 = vmatpush1.msra.mxu0 0.0
        %486 = vmatprep.subr.mxu0 0.0
        %487 = vmatpush1.msra.mxu0 0.0
        %488 = vmatprep.subr.mxu0 0.0
        %489 = vmatpush1.msra.mxu0 0.0
        %490 = vmatprep.subr.mxu0 0.0
        %491 = vmatpush1.msra.mxu0 0.0
        %492 = vmatprep.subr.mxu0 0.0
        %493 = vmatpush1.msra.mxu0 0.0
        %494 = vmatprep.subr.mxu0 0.0
        %495 = vmatpush1.msra.mxu0 0.0
        %496 = vmatprep.subr.mxu0 0.0
        %497 = vmatpush1.msra.mxu0 0.0
        %498 = vmatprep.subr.mxu0 0.0
        %499 = vmatpush1.msra.mxu0 0.0
        %500 = vmatprep.subr.mxu0 0.0
        %501 = vmatpush1.msra.mxu0 0.0
        %502 = vmatprep.subr.mxu0 0.0
        %503 = vmatpush1.msra.mxu0 0.0
        %504 = vmatprep.subr.mxu0 0.0
        %505 = vmatpush1.msra.mxu0 0.0
        %506 = vmatprep.subr.mxu0 0.0
        %507 = vmatpush1.msra.mxu0 0.0
        %508 = vmatprep.subr.mxu0 0.0
        %509 = vmatpush1.msra.mxu0 0.0
        %510 = vmatprep.subr.mxu0 0.0
        %511 = vmatpush1.msra.mxu0 0.0
        %512 = vmatprep.subr.mxu0 0.0
        %513 = vmatpush1.msra.mxu0 0.0
        %514 = vmatprep.subr.mxu0 0.0
        %515 = vmatpush1.msra.mxu0 0.0
        %516 = vmatprep.subr.mxu0 0.0
        %517 = vmatpush1.msra.mxu0 0.0
        %518 = vmatprep.subr.mxu0 0.0
        %519 = vmatpush1.msra.mxu0 0.0
        %520 = vmatprep.subr.mxu0 0.0
        %521 = vmatpush1.msra.mxu0 0.0
        %522 = vmatprep.subr.mxu0 0.0
        %523 = vmatpush1.msra.mxu0 0.0
        %524 = vmatprep.subr.mxu0 0.0
        %525 = vmatpush1.msra.mxu0 0.0
        %526 = vmatprep.subr.mxu0 0.0
        %527 = vmatpush1.msra.mxu0 0.0
        %528 = vmatprep.subr.mxu0 0.0
        %529 = vmatpush1.msra.mxu0 0.0
        %530 = vmatprep.subr.mxu0 0.0
        %531 = vmatpush1.msra.mxu0 0.0
        %532 = vmatprep.subr.mxu0 0.0
        %533 = vmatpush1.msra.mxu0 0.0
        %534 = vmatprep.subr.mxu0 0.0
        %535 = vmatpush1.msra.mxu0 0.0
        %536 = vmatprep.subr.mxu0 0.0
        %537 = vmatpush1.msra.mxu0 0.0
        %538 = vmatprep.subr.mxu0 0.0
        %539 = vmatpush1.msra.mxu0 0.0
        %540 = vmatprep.mubr.f32.mxu0 0.0
        %v541 = vand.u32 %v296, 4294901760
        %v542 = vsub.f32 %v296, %v541
        %543 = vmatmul.mubr.f32.gmra.mrb[0].mxu0 %v542
        %v544 = vpop.f32.mrb[0].mxu0
        %v545 = vadd.f32 %v465, %v544
        %v546 = vpop.f32.mrb[0].mxu0
        %547 = vdwg.mxu0
        %548 = vmatprep.subr.mxu0 0.0
        %v549 = vand.u32 %v247, 4294901760
        %550 = vmatpush1.msra.mxu0 %v549
        %551 = vmatprep.subr.mxu0 0.0
        %v552 = vand.u32 %v248, 4294901760
        %553 = vmatpush1.msra.mxu0 %v552
        %554 = vmatprep.subr.mxu0 0.0
        %v555 = vand.u32 %v249, 4294901760
        %556 = vmatpush1.msra.mxu0 %v555
        %557 = vmatprep.subr.mxu0 0.0
        %v558 = vand.u32 %v250, 4294901760
        %559 = vmatpush1.msra.mxu0 %v558
        %560 = vmatprep.subr.mxu0 0.0
        %561 = vmatpush1.msra.mxu0 0.0
        %562 = vmatprep.subr.mxu0 0.0
        %563 = vmatpush1.msra.mxu0 0.0
        %564 = vmatprep.subr.mxu0 0.0
        %565 = vmatpush1.msra.mxu0 0.0
        %566 = vmatprep.subr.mxu0 0.0
        %567 = vmatpush1.msra.mxu0 0.0
        %568 = vmatprep.subr.mxu0 0.0
        %569 = vmatpush1.msra.mxu0 0.0
        %570 = vmatprep.subr.mxu0 0.0
        %571 = vmatpush1.msra.mxu0 0.0
        %572 = vmatprep.subr.mxu0 0.0
        %573 = vmatpush1.msra.mxu0 0.0
        %574 = vmatprep.subr.mxu0 0.0
        %575 = vmatpush1.msra.mxu0 0.0
        %576 = vmatprep.subr.mxu0 0.0
        %577 = vmatpush1.msra.mxu0 0.0
        %578 = vmatprep.subr.mxu0 0.0
        %579 = vmatpush1.msra.mxu0 0.0
        %580 = vmatprep.subr.mxu0 0.0
        %581 = vmatpush1.msra.mxu0 0.0
        %582 = vmatprep.subr.mxu0 0.0
        %583 = vmatpush1.msra.mxu0 0.0
        %584 = vmatprep.subr.mxu0 0.0
        %585 = vmatpush1.msra.mxu0 0.0
        %586 = vmatprep.subr.mxu0 0.0
        %587 = vmatpush1.msra.mxu0 0.0
        %588 = vmatprep.subr.mxu0 0.0
        %589 = vmatpush1.msra.mxu0 0.0
        %590 = vmatprep.subr.mxu0 0.0
        %591 = vmatpush1.msra.mxu0 0.0
        %592 = vmatprep.subr.mxu0 0.0
        %593 = vmatpush1.msra.mxu0 0.0
        %594 = vmatprep.subr.mxu0 0.0
        %595 = vmatpush1.msra.mxu0 0.0
        %596 = vmatprep.subr.mxu0 0.0
        %597 = vmatpush1.msra.mxu0 0.0
        %598 = vmatprep.subr.mxu0 0.0
        %599 = vmatpush1.msra.mxu0 0.0
        %600 = vmatprep.subr.mxu0 0.0
        %601 = vmatpush1.msra.mxu0 0.0
        %602 = vmatprep.subr.mxu0 0.0
        %603 = vmatpush1.msra.mxu0 0.0
        %604 = vmatprep.subr.mxu0 0.0
        %605 = vmatpush1.msra.mxu0 0.0
        %606 = vmatprep.subr.mxu0 0.0
        %607 = vmatpush1.msra.mxu0 0.0
        %608 = vmatprep.subr.mxu0 0.0
        %609 = vmatpush1.msra.mxu0 0.0
        %610 = vmatprep.subr.mxu0 0.0
        %611 = vmatpush1.msra.mxu0 0.0
        %612 = vmatprep.subr.mxu0 0.0
        %613 = vmatpush1.msra.mxu0 0.0
        %614 = vmatprep.subr.mxu0 0.0
        %615 = vmatpush1.msra.mxu0 0.0
        %616 = vmatprep.mubr.f32.mxu0 0.0
        %v617 = vand.u32 %v296, 4294901760
        %v618 = vsub.f32 %v296, %v617
        %v619 = vand.u32 %v618, 4294901760
        %620 = vmatmul.mubr.f32.gmra.mrb[0].mxu0 %v619
        %v621 = vpop.f32.mrb[0].mxu0
        %v622 = vadd.f32 %v545, %v621
        %v623 = vpop.f32.mrb[0].mxu0
        %624 = vdwg.mxu0
        %625 = vmatprep.subr.mxu0 0.0
        %v626 = vand.u32 %v247, 4294901760
        %v627 = vsub.f32 %v247, %v626
        %v628 = vand.u32 %v627, 4294901760
        %629 = vmatpush1.msra.mxu0 %v628
        %630 = vmatprep.subr.mxu0 0.0
        %v631 = vand.u32 %v248, 4294901760
        %v632 = vsub.f32 %v248, %v631
        %v633 = vand.u32 %v632, 4294901760
        %634 = vmatpush1.msra.mxu0 %v633
        %635 = vmatprep.subr.mxu0 0.0
        %v636 = vand.u32 %v249, 4294901760
        %v637 = vsub.f32 %v249, %v636
        %v638 = vand.u32 %v637, 4294901760
        %639 = vmatpush1.msra.mxu0 %v638
        %640 = vmatprep.subr.mxu0 0.0
        %v641 = vand.u32 %v250, 4294901760
        %v642 = vsub.f32 %v250, %v641
        %v643 = vand.u32 %v642, 4294901760
        %644 = vmatpush1.msra.mxu0 %v643
        %645 = vmatprep.subr.mxu0 0.0
        %646 = vmatpush1.msra.mxu0 0.0
        %647 = vmatprep.subr.mxu0 0.0
        %648 = vmatpush1.msra.mxu0 0.0
        %649 = vmatprep.subr.mxu0 0.0
        %650 = vmatpush1.msra.mxu0 0.0
        %651 = vmatprep.subr.mxu0 0.0
        %652 = vmatpush1.msra.mxu0 0.0
        %653 = vmatprep.subr.mxu0 0.0
        %654 = vmatpush1.msra.mxu0 0.0
        %655 = vmatprep.subr.mxu0 0.0
        %656 = vmatpush1.msra.mxu0 0.0
        %657 = vmatprep.subr.mxu0 0.0
        %658 = vmatpush1.msra.mxu0 0.0
        %659 = vmatprep.subr.mxu0 0.0
        %660 = vmatpush1.msra.mxu0 0.0
        %661 = vmatprep.subr.mxu0 0.0
        %662 = vmatpush1.msra.mxu0 0.0
        %663 = vmatprep.subr.mxu0 0.0
        %664 = vmatpush1.msra.mxu0 0.0
        %665 = vmatprep.subr.mxu0 0.0
        %666 = vmatpush1.msra.mxu0 0.0
        %667 = vmatprep.subr.mxu0 0.0
        %668 = vmatpush1.msra.mxu0 0.0
        %669 = vmatprep.subr.mxu0 0.0
        %670 = vmatpush1.msra.mxu0 0.0
        %671 = vmatprep.subr.mxu0 0.0
        %672 = vmatpush1.msra.mxu0 0.0
        %673 = vmatprep.subr.mxu0 0.0
        %674 = vmatpush1.msra.mxu0 0.0
        %675 = vmatprep.subr.mxu0 0.0
        %676 = vmatpush1.msra.mxu0 0.0
        %677 = vmatprep.subr.mxu0 0.0
        %678 = vmatpush1.msra.mxu0 0.0
        %679 = vmatprep.subr.mxu0 0.0
        %680 = vmatpush1.msra.mxu0 0.0
        %681 = vmatprep.subr.mxu0 0.0
        %682 = vmatpush1.msra.mxu0 0.0
        %683 = vmatprep.subr.mxu0 0.0
        %684 = vmatpush1.msra.mxu0 0.0
        %685 = vmatprep.subr.mxu0 0.0
        %686 = vmatpush1.msra.mxu0 0.0
        %687 = vmatprep.subr.mxu0 0.0
        %688 = vmatpush1.msra.mxu0 0.0
        %689 = vmatprep.subr.mxu0 0.0
        %690 = vmatpush1.msra.mxu0 0.0
        %691 = vmatprep.subr.mxu0 0.0
        %692 = vmatpush1.msra.mxu0 0.0
        %693 = vmatprep.subr.mxu0 0.0
        %694 = vmatpush1.msra.mxu0 0.0
        %695 = vmatprep.subr.mxu0 0.0
        %696 = vmatpush1.msra.mxu0 0.0
        %697 = vmatprep.subr.mxu0 0.0
        %698 = vmatpush1.msra.mxu0 0.0
        %699 = vmatprep.subr.mxu0 0.0
        %700 = vmatpush1.msra.mxu0 0.0
        %701 = vmatprep.mubr.f32.mxu0 0.0
        %v702 = vand.u32 %v296, 4294901760
        %703 = vmatmul.mubr.f32.gmra.mrb[0].mxu0 %v702
        %v704 = vpop.f32.mrb[0].mxu0
        %v705 = vadd.f32 %v622, %v704
        %v706 = vpop.f32.mrb[0].mxu0
        %707 = vdwg.mxu0
        %708 = vmatprep.subr.mxu0 0.0
        %v709 = vand.u32 %v247, 4294901760
        %710 = vmatpush1.msra.mxu0 %v709
        %711 = vmatprep.subr.mxu0 0.0
        %v712 = vand.u32 %v248, 4294901760
        %713 = vmatpush1.msra.mxu0 %v712
        %714 = vmatprep.subr.mxu0 0.0
        %v715 = vand.u32 %v249, 4294901760
        %716 = vmatpush1.msra.mxu0 %v715
        %717 = vmatprep.subr.mxu0 0.0
        %v718 = vand.u32 %v250, 4294901760
        %719 = vmatpush1.msra.mxu0 %v718
        %720 = vmatprep.subr.mxu0 0.0
        %721 = vmatpush1.msra.mxu0 0.0
        %722 = vmatprep.subr.mxu0 0.0
        %723 = vmatpush1.msra.mxu0 0.0
        %724 = vmatprep.subr.mxu0 0.0
        %725 = vmatpush1.msra.mxu0 0.0
        %726 = vmatprep.subr.mxu0 0.0
        %727 = vmatpush1.msra.mxu0 0.0
        %728 = vmatprep.subr.mxu0 0.0
        %729 = vmatpush1.msra.mxu0 0.0
        %730 = vmatprep.subr.mxu0 0.0
        %731 = vmatpush1.msra.mxu0 0.0
        %732 = vmatprep.subr.mxu0 0.0
        %733 = vmatpush1.msra.mxu0 0.0
        %734 = vmatprep.subr.mxu0 0.0
        %735 = vmatpush1.msra.mxu0 0.0
        %736 = vmatprep.subr.mxu0 0.0
        %737 = vmatpush1.msra.mxu0 0.0
        %738 = vmatprep.subr.mxu0 0.0
        %739 = vmatpush1.msra.mxu0 0.0
        %740 = vmatprep.subr.mxu0 0.0
        %741 = vmatpush1.msra.mxu0 0.0
        %742 = vmatprep.subr.mxu0 0.0
        %743 = vmatpush1.msra.mxu0 0.0
        %744 = vmatprep.subr.mxu0 0.0
        %745 = vmatpush1.msra.mxu0 0.0
        %746 = vmatprep.subr.mxu0 0.0
        %747 = vmatpush1.msra.mxu0 0.0
        %748 = vmatprep.subr.mxu0 0.0
        %749 = vmatpush1.msra.mxu0 0.0
        %750 = vmatprep.subr.mxu0 0.0
        %751 = vmatpush1.msra.mxu0 0.0
        %752 = vmatprep.subr.mxu0 0.0
        %753 = vmatpush1.msra.mxu0 0.0
        %754 = vmatprep.subr.mxu0 0.0
        %755 = vmatpush1.msra.mxu0 0.0
        %756 = vmatprep.subr.mxu0 0.0
        %757 = vmatpush1.msra.mxu0 0.0
        %758 = vmatprep.subr.mxu0 0.0
        %759 = vmatpush1.msra.mxu0 0.0
        %760 = vmatprep.subr.mxu0 0.0
        %761 = vmatpush1.msra.mxu0 0.0
        %762 = vmatprep.subr.mxu0 0.0
        %763 = vmatpush1.msra.mxu0 0.0
        %764 = vmatprep.subr.mxu0 0.0
        %765 = vmatpush1.msra.mxu0 0.0
        %766 = vmatprep.subr.mxu0 0.0
        %767 = vmatpush1.msra.mxu0 0.0
        %768 = vmatprep.subr.mxu0 0.0
        %769 = vmatpush1.msra.mxu0 0.0
        %770 = vmatprep.subr.mxu0 0.0
        %771 = vmatpush1.msra.mxu0 0.0
        %772 = vmatprep.subr.mxu0 0.0
        %773 = vmatpush1.msra.mxu0 0.0
        %774 = vmatprep.subr.mxu0 0.0
        %775 = vmatpush1.msra.mxu0 0.0
        %776 = vmatprep.mubr.f32.mxu0 0.0
        %v777 = vand.u32 %v296, 4294901760
        %778 = vmatmul.mubr.f32.gmra.mrb[0].mxu0 %v777
        %v779 = vpop.f32.mrb[0].mxu0
        %v780 = vadd.f32 %v705, %v779
        %v781 = vpop.f32.mrb[0].mxu0
        %782 = vdwg.mxu0
        %783 = vmin.xlane.f32.xlu0 %v780
        %v784 = vpop.xlane.xlu0 %783
        %vm785 = vcmp.eq.f32.partialorder %v780, %v784
        %v786 = vsel %vm785, %v253, 128
        %v787 = vand.u32 %v786, 65535
        %v788 = vshra.s32 %v786, 16
        %v789 = vcvt.s32.f32 %v787
        %v790 = vcvt.s32.f32 %v788
        %791 = vmin.xlane.f32.xlu0 %v790
        %v792 = vpop.xlane.xlu0 %791
        %vm793 = vcmp.eq.f32.partialorder %v790, %v792
        %v794 = vsel %vm793, %v789, inf
        %795 = vmin.xlane.f32.xlu0 %v794
        %v796 = vpop.xlane.xlu0 %795
        %v797 = vcvt.f32.s32 %v796
        %v798 = vcvt.f32.s32 %v792
        %v799 = vshll.u32 %v798, 16
        %v800 = vadd.s32 %v799, %v797
        %vm801 = vcmp.eq.s32.totalorder %v253, %v800
        %v802 = vsel %vm801, 1, 0
        %v803 = vcvt.s32.f32 %v802
        %804 = vmatprep.subr.mxu0 0.0
        %v805 = vand.u32 %v231, 4294901760
        %806 = vmatpush1.msra.mxu0 %v805
        %807 = vmatprep.subr.mxu0 0.0
        %v808 = vand.u32 %v232, 4294901760
        %809 = vmatpush1.msra.mxu0 %v808
        %810 = vmatprep.subr.mxu0 0.0
        %v811 = vand.u32 %v233, 4294901760
        %812 = vmatpush1.msra.mxu0 %v811
        %813 = vmatprep.subr.mxu0 0.0
        %v814 = vand.u32 %v234, 4294901760
        %815 = vmatpush1.msra.mxu0 %v814
        %816 = vmatprep.subr.mxu0 0.0
        %v817 = vand.u32 %v235, 4294901760
        %818 = vmatpush1.msra.mxu0 %v817
        %819 = vmatprep.subr.mxu0 0.0
        %v820 = vand.u32 %v236, 4294901760
        %821 = vmatpush1.msra.mxu0 %v820
        %822 = vmatprep.subr.mxu0 0.0
        %v823 = vand.u32 %v237, 4294901760
        %824 = vmatpush1.msra.mxu0 %v823
        %825 = vmatprep.subr.mxu0 0.0
        %v826 = vand.u32 %v238, 4294901760
        %827 = vmatpush1.msra.mxu0 %v826
        %828 = vmatprep.subr.mxu0 0.0
        %v829 = vand.u32 %v239, 4294901760
        %830 = vmatpush1.msra.mxu0 %v829
        %831 = vmatprep.subr.mxu0 0.0
        %v832 = vand.u32 %v240, 4294901760
        %833 = vmatpush1.msra.mxu0 %v832
        %834 = vmatprep.subr.mxu0 0.0
        %v835 = vand.u32 %v241, 4294901760
        %836 = vmatpush1.msra.mxu0 %v835
        %837 = vmatprep.subr.mxu0 0.0
        %v838 = vand.u32 %v242, 4294901760
        %839 = vmatpush1.msra.mxu0 %v838
        %840 = vmatprep.subr.mxu0 0.0
        %v841 = vand.u32 %v243, 4294901760
        %842 = vmatpush1.msra.mxu0 %v841
        %843 = vmatprep.subr.mxu0 0.0
        %v844 = vand.u32 %v244, 4294901760
        %845 = vmatpush1.msra.mxu0 %v844
        %846 = vmatprep.subr.mxu0 0.0
        %v847 = vand.u32 %v245, 4294901760
        %848 = vmatpush1.msra.mxu0 %v847
        %849 = vmatprep.subr.mxu0 0.0
        %v850 = vand.u32 %v246, 4294901760
        %851 = vmatpush1.msra.mxu0 %v850
        %852 = vmatprep.subr.mxu0 0.0
        %853 = vmatpush1.msra.mxu0 0.0
        %854 = vmatprep.subr.mxu0 0.0
        %855 = vmatpush1.msra.mxu0 0.0
        %856 = vmatprep.subr.mxu0 0.0
        %857 = vmatpush1.msra.mxu0 0.0
        %858 = vmatprep.subr.mxu0 0.0
        %859 = vmatpush1.msra.mxu0 0.0
        %860 = vmatprep.subr.mxu0 0.0
        %861 = vmatpush1.msra.mxu0 0.0
        %862 = vmatprep.subr.mxu0 0.0
        %863 = vmatpush1.msra.mxu0 0.0
        %864 = vmatprep.subr.mxu0 0.0
        %865 = vmatpush1.msra.mxu0 0.0
        %866 = vmatprep.subr.mxu0 0.0
        %867 = vmatpush1.msra.mxu0 0.0
        %868 = vmatprep.subr.mxu0 0.0
        %869 = vmatpush1.msra.mxu0 0.0
        %870 = vmatprep.subr.mxu0 0.0
        %871 = vmatpush1.msra.mxu0 0.0
        %872 = vmatprep.subr.mxu0 0.0
        %873 = vmatpush1.msra.mxu0 0.0
        %874 = vmatprep.subr.mxu0 0.0
        %875 = vmatpush1.msra.mxu0 0.0
        %876 = vmatprep.subr.mxu0 0.0
        %877 = vmatpush1.msra.mxu0 0.0
        %878 = vmatprep.subr.mxu0 0.0
        %879 = vmatpush1.msra.mxu0 0.0
        %880 = vmatprep.subr.mxu0 0.0
        %881 = vmatpush1.msra.mxu0 0.0
        %882 = vmatprep.subr.mxu0 0.0
        %883 = vmatpush1.msra.mxu0 0.0
        %884 = vmatprep.mubr.f32.mxu0 0.0
        %v885 = vand.u32 %v803, 4294901760
        %v886 = vsub.f32 %v803, %v885
        %v887 = vand.u32 %v886, 4294901760
        %v888 = vsub.f32 %v886, %v887
        %v889 = vand.u32 %v888, 4294901760
        %890 = vmatmul.mubr.f32.gmra.mrb[0].mxu0 %v889
        %v891 = vpop.f32.mrb[0].mxu0
        %v892 = vadd.f32 0.0, %v891
        %v893 = vpop.f32.mrb[0].mxu0
        %894 = vdwg.mxu0
        %895 = vmatprep.subr.mxu0 0.0
        %v896 = vand.u32 %v231, 4294901760
        %v897 = vsub.f32 %v231, %v896
        %v898 = vand.u32 %v897, 4294901760
        %v899 = vsub.f32 %v897, %v898
        %v900 = vand.u32 %v899, 4294901760
        %901 = vmatpush1.msra.mxu0 %v900
        %902 = vmatprep.subr.mxu0 0.0
        %v903 = vand.u32 %v232, 4294901760
        %v904 = vsub.f32 %v232, %v903
        %v905 = vand.u32 %v904, 4294901760
        %v906 = vsub.f32 %v904, %v905
        %v907 = vand.u32 %v906, 4294901760
        %908 = vmatpush1.msra.mxu0 %v907
        %909 = vmatprep.subr.mxu0 0.0
        %v910 = vand.u32 %v233, 4294901760
        %v911 = vsub.f32 %v233, %v910
        %v912 = vand.u32 %v911, 4294901760
        %v913 = vsub.f32 %v911, %v912
        %v914 = vand.u32 %v913, 4294901760
        %915 = vmatpush1.msra.mxu0 %v914
        %916 = vmatprep.subr.mxu0 0.0
        %v917 = vand.u32 %v234, 4294901760
        %v918 = vsub.f32 %v234, %v917
        %v919 = vand.u32 %v918, 4294901760
        %v920 = vsub.f32 %v918, %v919
        %v921 = vand.u32 %v920, 4294901760
        %922 = vmatpush1.msra.mxu0 %v921
        %923 = vmatprep.subr.mxu0 0.0
        %v924 = vand.u32 %v235, 4294901760
        %v925 = vsub.f32 %v235, %v924
        %v926 = vand.u32 %v925, 4294901760
        %v927 = vsub.f32 %v925, %v926
        %v928 = vand.u32 %v927, 4294901760
        %929 = vmatpush1.msra.mxu0 %v928
        %930 = vmatprep.subr.mxu0 0.0
        %v931 = vand.u32 %v236, 4294901760
        %v932 = vsub.f32 %v236, %v931
        %v933 = vand.u32 %v932, 4294901760
        %v934 = vsub.f32 %v932, %v933
        %v935 = vand.u32 %v934, 4294901760
        %936 = vmatpush1.msra.mxu0 %v935
        %937 = vmatprep.subr.mxu0 0.0
        %v938 = vand.u32 %v237, 4294901760
        %v939 = vsub.f32 %v237, %v938
        %v940 = vand.u32 %v939, 4294901760
        %v941 = vsub.f32 %v939, %v940
        %v942 = vand.u32 %v941, 4294901760
        %943 = vmatpush1.msra.mxu0 %v942
        %944 = vmatprep.subr.mxu0 0.0
        %v945 = vand.u32 %v238, 4294901760
        %v946 = vsub.f32 %v238, %v945
        %v947 = vand.u32 %v946, 4294901760
        %v948 = vsub.f32 %v946, %v947
        %v949 = vand.u32 %v948, 4294901760
        %950 = vmatpush1.msra.mxu0 %v949
        %951 = vmatprep.subr.mxu0 0.0
        %v952 = vand.u32 %v239, 4294901760
        %v953 = vsub.f32 %v239, %v952
        %v954 = vand.u32 %v953, 4294901760
        %v955 = vsub.f32 %v953, %v954
        %v956 = vand.u32 %v955, 4294901760
        %957 = vmatpush1.msra.mxu0 %v956
        %958 = vmatprep.subr.mxu0 0.0
        %v959 = vand.u32 %v240, 4294901760
        %v960 = vsub.f32 %v240, %v959
        %v961 = vand.u32 %v960, 4294901760
        %v962 = vsub.f32 %v960, %v961
        %v963 = vand.u32 %v962, 4294901760
        %964 = vmatpush1.msra.mxu0 %v963
        %965 = vmatprep.subr.mxu0 0.0
        %v966 = vand.u32 %v241, 4294901760
        %v967 = vsub.f32 %v241, %v966
        %v968 = vand.u32 %v967, 4294901760
        %v969 = vsub.f32 %v967, %v968
        %v970 = vand.u32 %v969, 4294901760
        %971 = vmatpush1.msra.mxu0 %v970
        %972 = vmatprep.subr.mxu0 0.0
        %v973 = vand.u32 %v242, 4294901760
        %v974 = vsub.f32 %v242, %v973
        %v975 = vand.u32 %v974, 4294901760
        %v976 = vsub.f32 %v974, %v975
        %v977 = vand.u32 %v976, 4294901760
        %978 = vmatpush1.msra.mxu0 %v977
        %979 = vmatprep.subr.mxu0 0.0
        %v980 = vand.u32 %v243, 4294901760
        %v981 = vsub.f32 %v243, %v980
        %v982 = vand.u32 %v981, 4294901760
        %v983 = vsub.f32 %v981, %v982
        %v984 = vand.u32 %v983, 4294901760
        %985 = vmatpush1.msra.mxu0 %v984
        %986 = vmatprep.subr.mxu0 0.0
        %v987 = vand.u32 %v244, 4294901760
        %v988 = vsub.f32 %v244, %v987
        %v989 = vand.u32 %v988, 4294901760
        %v990 = vsub.f32 %v988, %v989
        %v991 = vand.u32 %v990, 4294901760
        %992 = vmatpush1.msra.mxu0 %v991
        %993 = vmatprep.subr.mxu0 0.0
        %v994 = vand.u32 %v245, 4294901760
        %v995 = vsub.f32 %v245, %v994
        %v996 = vand.u32 %v995, 4294901760
        %v997 = vsub.f32 %v995, %v996
        %v998 = vand.u32 %v997, 4294901760
        %999 = vmatpush1.msra.mxu0 %v998
        %1000 = vmatprep.subr.mxu0 0.0
        %v1001 = vand.u32 %v246, 4294901760
        %v1002 = vsub.f32 %v246, %v1001
        %v1003 = vand.u32 %v1002, 4294901760
        %v1004 = vsub.f32 %v1002, %v1003
        %v1005 = vand.u32 %v1004, 4294901760
        %1006 = vmatpush1.msra.mxu0 %v1005
        %1007 = vmatprep.subr.mxu0 0.0
        %1008 = vmatpush1.msra.mxu0 0.0
        %1009 = vmatprep.subr.mxu0 0.0
        %1010 = vmatpush1.msra.mxu0 0.0
        %1011 = vmatprep.subr.mxu0 0.0
        %1012 = vmatpush1.msra.mxu0 0.0
        %1013 = vmatprep.subr.mxu0 0.0
        %1014 = vmatpush1.msra.mxu0 0.0
        %1015 = vmatprep.subr.mxu0 0.0
        %1016 = vmatpush1.msra.mxu0 0.0
        %1017 = vmatprep.subr.mxu0 0.0
        %1018 = vmatpush1.msra.mxu0 0.0
        %1019 = vmatprep.subr.mxu0 0.0
        %1020 = vmatpush1.msra.mxu0 0.0
        %1021 = vmatprep.subr.mxu0 0.0
        %1022 = vmatpush1.msra.mxu0 0.0
        %1023 = vmatprep.subr.mxu0 0.0
        %1024 = vmatpush1.msra.mxu0 0.0
        %1025 = vmatprep.subr.mxu0 0.0
        %1026 = vmatpush1.msra.mxu0 0.0
        %1027 = vmatprep.subr.mxu0 0.0
        %1028 = vmatpush1.msra.mxu0 0.0
        %1029 = vmatprep.subr.mxu0 0.0
        %1030 = vmatpush1.msra.mxu0 0.0
        %1031 = vmatprep.subr.mxu0 0.0
        %1032 = vmatpush1.msra.mxu0 0.0
        %1033 = vmatprep.subr.mxu0 0.0
        %1034 = vmatpush1.msra.mxu0 0.0
        %1035 = vmatprep.subr.mxu0 0.0
        %1036 = vmatpush1.msra.mxu0 0.0
        %1037 = vmatprep.subr.mxu0 0.0
        %1038 = vmatpush1.msra.mxu0 0.0
        %1039 = vmatprep.mubr.f32.mxu0 0.0
        %v1040 = vand.u32 %v803, 4294901760
        %1041 = vmatmul.mubr.f32.gmra.mrb[0].mxu0 %v1040
        %v1042 = vpop.f32.mrb[0].mxu0
        %v1043 = vadd.f32 %v892, %v1042
        %v1044 = vpop.f32.mrb[0].mxu0
        %1045 = vdwg.mxu0
        %1046 = vmatprep.subr.mxu0 0.0
        %v1047 = vand.u32 %v231, 4294901760
        %v1048 = vsub.f32 %v231, %v1047
        %1049 = vmatpush1.msra.mxu0 %v1048
        %1050 = vmatprep.subr.mxu0 0.0
        %v1051 = vand.u32 %v232, 4294901760
        %v1052 = vsub.f32 %v232, %v1051
        %1053 = vmatpush1.msra.mxu0 %v1052
        %1054 = vmatprep.subr.mxu0 0.0
        %v1055 = vand.u32 %v233, 4294901760
        %v1056 = vsub.f32 %v233, %v1055
        %1057 = vmatpush1.msra.mxu0 %v1056
        %1058 = vmatprep.subr.mxu0 0.0
        %v1059 = vand.u32 %v234, 4294901760
        %v1060 = vsub.f32 %v234, %v1059
        %1061 = vmatpush1.msra.mxu0 %v1060
        %1062 = vmatprep.subr.mxu0 0.0
        %v1063 = vand.u32 %v235, 4294901760
        %v1064 = vsub.f32 %v235, %v1063
        %1065 = vmatpush1.msra.mxu0 %v1064
        %1066 = vmatprep.subr.mxu0 0.0
        %v1067 = vand.u32 %v236, 4294901760
        %v1068 = vsub.f32 %v236, %v1067
        %1069 = vmatpush1.msra.mxu0 %v1068
        %1070 = vmatprep.subr.mxu0 0.0
        %v1071 = vand.u32 %v237, 4294901760
        %v1072 = vsub.f32 %v237, %v1071
        %1073 = vmatpush1.msra.mxu0 %v1072
        %1074 = vmatprep.subr.mxu0 0.0
        %v1075 = vand.u32 %v238, 4294901760
        %v1076 = vsub.f32 %v238, %v1075
        %1077 = vmatpush1.msra.mxu0 %v1076
        %1078 = vmatprep.subr.mxu0 0.0
        %v1079 = vand.u32 %v239, 4294901760
        %v1080 = vsub.f32 %v239, %v1079
        %1081 = vmatpush1.msra.mxu0 %v1080
        %1082 = vmatprep.subr.mxu0 0.0
        %v1083 = vand.u32 %v240, 4294901760
        %v1084 = vsub.f32 %v240, %v1083
        %1085 = vmatpush1.msra.mxu0 %v1084
        %1086 = vmatprep.subr.mxu0 0.0
        %v1087 = vand.u32 %v241, 4294901760
        %v1088 = vsub.f32 %v241, %v1087
        %1089 = vmatpush1.msra.mxu0 %v1088
        %1090 = vmatprep.subr.mxu0 0.0
        %v1091 = vand.u32 %v242, 4294901760
        %v1092 = vsub.f32 %v242, %v1091
        %1093 = vmatpush1.msra.mxu0 %v1092
        %1094 = vmatprep.subr.mxu0 0.0
        %v1095 = vand.u32 %v243, 4294901760
        %v1096 = vsub.f32 %v243, %v1095
        %1097 = vmatpush1.msra.mxu0 %v1096
        %1098 = vmatprep.subr.mxu0 0.0
        %v1099 = vand.u32 %v244, 4294901760
        %v1100 = vsub.f32 %v244, %v1099
        %1101 = vmatpush1.msra.mxu0 %v1100
        %1102 = vmatprep.subr.mxu0 0.0
        %v1103 = vand.u32 %v245, 4294901760
        %v1104 = vsub.f32 %v245, %v1103
        %1105 = vmatpush1.msra.mxu0 %v1104
        %1106 = vmatprep.subr.mxu0 0.0
        %v1107 = vand.u32 %v246, 4294901760
        %v1108 = vsub.f32 %v246, %v1107
        %1109 = vmatpush1.msra.mxu0 %v1108
        %1110 = vmatprep.subr.mxu0 0.0
        %1111 = vmatpush1.msra.mxu0 0.0
        %1112 = vmatprep.subr.mxu0 0.0
        %1113 = vmatpush1.msra.mxu0 0.0
        %1114 = vmatprep.subr.mxu0 0.0
        %1115 = vmatpush1.msra.mxu0 0.0
        %1116 = vmatprep.subr.mxu0 0.0
        %1117 = vmatpush1.msra.mxu0 0.0
        %1118 = vmatprep.subr.mxu0 0.0
        %1119 = vmatpush1.msra.mxu0 0.0
        %1120 = vmatprep.subr.mxu0 0.0
        %1121 = vmatpush1.msra.mxu0 0.0
        %1122 = vmatprep.subr.mxu0 0.0
        %1123 = vmatpush1.msra.mxu0 0.0
        %1124 = vmatprep.subr.mxu0 0.0
        %1125 = vmatpush1.msra.mxu0 0.0
        %1126 = vmatprep.subr.mxu0 0.0
        %1127 = vmatpush1.msra.mxu0 0.0
        %1128 = vmatprep.subr.mxu0 0.0
        %1129 = vmatpush1.msra.mxu0 0.0
        %1130 = vmatprep.subr.mxu0 0.0
        %1131 = vmatpush1.msra.mxu0 0.0
        %1132 = vmatprep.subr.mxu0 0.0
        %1133 = vmatpush1.msra.mxu0 0.0
        %1134 = vmatprep.subr.mxu0 0.0
        %1135 = vmatpush1.msra.mxu0 0.0
        %1136 = vmatprep.subr.mxu0 0.0
        %1137 = vmatpush1.msra.mxu0 0.0
        %1138 = vmatprep.subr.mxu0 0.0
        %1139 = vmatpush1.msra.mxu0 0.0
        %1140 = vmatprep.subr.mxu0 0.0
        %1141 = vmatpush1.msra.mxu0 0.0
        %1142 = vmatprep.mubr.f32.mxu0 0.0
        %v1143 = vand.u32 %v803, 4294901760
        %v1144 = vsub.f32 %v803, %v1143
        %1145 = vmatmul.mubr.f32.gmra.mrb[0].mxu0 %v1144
        %v1146 = vpop.f32.mrb[0].mxu0
        %v1147 = vadd.f32 %v1043, %v1146
        %v1148 = vpop.f32.mrb[0].mxu0
        %1149 = vdwg.mxu0
        %1150 = vmatprep.subr.mxu0 0.0
        %v1151 = vand.u32 %v231, 4294901760
        %1152 = vmatpush1.msra.mxu0 %v1151
        %1153 = vmatprep.subr.mxu0 0.0
        %v1154 = vand.u32 %v232, 4294901760
        %1155 = vmatpush1.msra.mxu0 %v1154
        %1156 = vmatprep.subr.mxu0 0.0
        %v1157 = vand.u32 %v233, 4294901760
        %1158 = vmatpush1.msra.mxu0 %v1157
        %1159 = vmatprep.subr.mxu0 0.0
        %v1160 = vand.u32 %v234, 4294901760
        %1161 = vmatpush1.msra.mxu0 %v1160
        %1162 = vmatprep.subr.mxu0 0.0
        %v1163 = vand.u32 %v235, 4294901760
        %1164 = vmatpush1.msra.mxu0 %v1163
        %1165 = vmatprep.subr.mxu0 0.0
        %v1166 = vand.u32 %v236, 4294901760
        %1167 = vmatpush1.msra.mxu0 %v1166
        %1168 = vmatprep.subr.mxu0 0.0
        %v1169 = vand.u32 %v237, 4294901760
        %1170 = vmatpush1.msra.mxu0 %v1169
        %1171 = vmatprep.subr.mxu0 0.0
        %v1172 = vand.u32 %v238, 4294901760
        %1173 = vmatpush1.msra.mxu0 %v1172
        %1174 = vmatprep.subr.mxu0 0.0
        %v1175 = vand.u32 %v239, 4294901760
        %1176 = vmatpush1.msra.mxu0 %v1175
        %1177 = vmatprep.subr.mxu0 0.0
        %v1178 = vand.u32 %v240, 4294901760
        %1179 = vmatpush1.msra.mxu0 %v1178
        %1180 = vmatprep.subr.mxu0 0.0
        %v1181 = vand.u32 %v241, 4294901760
        %1182 = vmatpush1.msra.mxu0 %v1181
        %1183 = vmatprep.subr.mxu0 0.0
        %v1184 = vand.u32 %v242, 4294901760
        %1185 = vmatpush1.msra.mxu0 %v1184
        %1186 = vmatprep.subr.mxu0 0.0
        %v1187 = vand.u32 %v243, 4294901760
        %1188 = vmatpush1.msra.mxu0 %v1187
        %1189 = vmatprep.subr.mxu0 0.0
        %v1190 = vand.u32 %v244, 4294901760
        %1191 = vmatpush1.msra.mxu0 %v1190
        %1192 = vmatprep.subr.mxu0 0.0
        %v1193 = vand.u32 %v245, 4294901760
        %1194 = vmatpush1.msra.mxu0 %v1193
        %1195 = vmatprep.subr.mxu0 0.0
        %v1196 = vand.u32 %v246, 4294901760
        %1197 = vmatpush1.msra.mxu0 %v1196
        %1198 = vmatprep.subr.mxu0 0.0
        %1199 = vmatpush1.msra.mxu0 0.0
        %1200 = vmatprep.subr.mxu0 0.0
        %1201 = vmatpush1.msra.mxu0 0.0
        %1202 = vmatprep.subr.mxu0 0.0
        %1203 = vmatpush1.msra.mxu0 0.0
        %1204 = vmatprep.subr.mxu0 0.0
        %1205 = vmatpush1.msra.mxu0 0.0
        %1206 = vmatprep.subr.mxu0 0.0
        %1207 = vmatpush1.msra.mxu0 0.0
        %1208 = vmatprep.subr.mxu0 0.0
        %1209 = vmatpush1.msra.mxu0 0.0
        %1210 = vmatprep.subr.mxu0 0.0
        %1211 = vmatpush1.msra.mxu0 0.0
        %1212 = vmatprep.subr.mxu0 0.0
        %1213 = vmatpush1.msra.mxu0 0.0
        %1214 = vmatprep.subr.mxu0 0.0
        %1215 = vmatpush1.msra.mxu0 0.0
        %1216 = vmatprep.subr.mxu0 0.0
        %1217 = vmatpush1.msra.mxu0 0.0
        %1218 = vmatprep.subr.mxu0 0.0
        %1219 = vmatpush1.msra.mxu0 0.0
        %1220 = vmatprep.subr.mxu0 0.0
        %1221 = vmatpush1.msra.mxu0 0.0
        %1222 = vmatprep.subr.mxu0 0.0
        %1223 = vmatpush1.msra.mxu0 0.0
        %1224 = vmatprep.subr.mxu0 0.0
        %1225 = vmatpush1.msra.mxu0 0.0
        %1226 = vmatprep.subr.mxu0 0.0
        %1227 = vmatpush1.msra.mxu0 0.0
        %1228 = vmatprep.subr.mxu0 0.0
        %1229 = vmatpush1.msra.mxu0 0.0
        %1230 = vmatprep.mubr.f32.mxu0 0.0
        %v1231 = vand.u32 %v803, 4294901760
        %v1232 = vsub.f32 %v803, %v1231
        %v1233 = vand.u32 %v1232, 4294901760
        %1234 = vmatmul.mubr.f32.gmra.mrb[0].mxu0 %v1233
        %v1235 = vpop.f32.mrb[0].mxu0
        %v1236 = vadd.f32 %v1147, %v1235
        %v1237 = vpop.f32.mrb[0].mxu0
        %1238 = vdwg.mxu0
        %1239 = vmatprep.subr.mxu0 0.0
        %v1240 = vand.u32 %v231, 4294901760
        %v1241 = vsub.f32 %v231, %v1240
        %v1242 = vand.u32 %v1241, 4294901760
        %1243 = vmatpush1.msra.mxu0 %v1242
        %1244 = vmatprep.subr.mxu0 0.0
        %v1245 = vand.u32 %v232, 4294901760
        %v1246 = vsub.f32 %v232, %v1245
        %v1247 = vand.u32 %v1246, 4294901760
        %1248 = vmatpush1.msra.mxu0 %v1247
        %1249 = vmatprep.subr.mxu0 0.0
        %v1250 = vand.u32 %v233, 4294901760
        %v1251 = vsub.f32 %v233, %v1250
        %v1252 = vand.u32 %v1251, 4294901760
        %1253 = vmatpush1.msra.mxu0 %v1252
        %1254 = vmatprep.subr.mxu0 0.0
        %v1255 = vand.u32 %v234, 4294901760
        %v1256 = vsub.f32 %v234, %v1255
        %v1257 = vand.u32 %v1256, 4294901760
        %1258 = vmatpush1.msra.mxu0 %v1257
        %1259 = vmatprep.subr.mxu0 0.0
        %v1260 = vand.u32 %v235, 4294901760
        %v1261 = vsub.f32 %v235, %v1260
        %v1262 = vand.u32 %v1261, 4294901760
        %1263 = vmatpush1.msra.mxu0 %v1262
        %1264 = vmatprep.subr.mxu0 0.0
        %v1265 = vand.u32 %v236, 4294901760
        %v1266 = vsub.f32 %v236, %v1265
        %v1267 = vand.u32 %v1266, 4294901760
        %1268 = vmatpush1.msra.mxu0 %v1267
        %1269 = vmatprep.subr.mxu0 0.0
        %v1270 = vand.u32 %v237, 4294901760
        %v1271 = vsub.f32 %v237, %v1270
        %v1272 = vand.u32 %v1271, 4294901760
        %1273 = vmatpush1.msra.mxu0 %v1272
        %1274 = vmatprep.subr.mxu0 0.0
        %v1275 = vand.u32 %v238, 4294901760
        %v1276 = vsub.f32 %v238, %v1275
        %v1277 = vand.u32 %v1276, 4294901760
        %1278 = vmatpush1.msra.mxu0 %v1277
        %1279 = vmatprep.subr.mxu0 0.0
        %v1280 = vand.u32 %v239, 4294901760
        %v1281 = vsub.f32 %v239, %v1280
        %v1282 = vand.u32 %v1281, 4294901760
        %1283 = vmatpush1.msra.mxu0 %v1282
        %1284 = vmatprep.subr.mxu0 0.0
        %v1285 = vand.u32 %v240, 4294901760
        %v1286 = vsub.f32 %v240, %v1285
        %v1287 = vand.u32 %v1286, 4294901760
        %1288 = vmatpush1.msra.mxu0 %v1287
        %1289 = vmatprep.subr.mxu0 0.0
        %v1290 = vand.u32 %v241, 4294901760
        %v1291 = vsub.f32 %v241, %v1290
        %v1292 = vand.u32 %v1291, 4294901760
        %1293 = vmatpush1.msra.mxu0 %v1292
        %1294 = vmatprep.subr.mxu0 0.0
        %v1295 = vand.u32 %v242, 4294901760
        %v1296 = vsub.f32 %v242, %v1295
        %v1297 = vand.u32 %v1296, 4294901760
        %1298 = vmatpush1.msra.mxu0 %v1297
        %1299 = vmatprep.subr.mxu0 0.0
        %v1300 = vand.u32 %v243, 4294901760
        %v1301 = vsub.f32 %v243, %v1300
        %v1302 = vand.u32 %v1301, 4294901760
        %1303 = vmatpush1.msra.mxu0 %v1302
        %1304 = vmatprep.subr.mxu0 0.0
        %v1305 = vand.u32 %v244, 4294901760
        %v1306 = vsub.f32 %v244, %v1305
        %v1307 = vand.u32 %v1306, 4294901760
        %1308 = vmatpush1.msra.mxu0 %v1307
        %1309 = vmatprep.subr.mxu0 0.0
        %v1310 = vand.u32 %v245, 4294901760
        %v1311 = vsub.f32 %v245, %v1310
        %v1312 = vand.u32 %v1311, 4294901760
        %1313 = vmatpush1.msra.mxu0 %v1312
        %1314 = vmatprep.subr.mxu0 0.0
        %v1315 = vand.u32 %v246, 4294901760
        %v1316 = vsub.f32 %v246, %v1315
        %v1317 = vand.u32 %v1316, 4294901760
        %1318 = vmatpush1.msra.mxu0 %v1317
        %1319 = vmatprep.subr.mxu0 0.0
        %1320 = vmatpush1.msra.mxu0 0.0
        %1321 = vmatprep.subr.mxu0 0.0
        %1322 = vmatpush1.msra.mxu0 0.0
        %1323 = vmatprep.subr.mxu0 0.0
        %1324 = vmatpush1.msra.mxu0 0.0
        %1325 = vmatprep.subr.mxu0 0.0
        %1326 = vmatpush1.msra.mxu0 0.0
        %1327 = vmatprep.subr.mxu0 0.0
        %1328 = vmatpush1.msra.mxu0 0.0
        %1329 = vmatprep.subr.mxu0 0.0
        %1330 = vmatpush1.msra.mxu0 0.0
        %1331 = vmatprep.subr.mxu0 0.0
        %1332 = vmatpush1.msra.mxu0 0.0
        %1333 = vmatprep.subr.mxu0 0.0
        %1334 = vmatpush1.msra.mxu0 0.0
        %1335 = vmatprep.subr.mxu0 0.0
        %1336 = vmatpush1.msra.mxu0 0.0
        %1337 = vmatprep.subr.mxu0 0.0
        %1338 = vmatpush1.msra.mxu0 0.0
        %1339 = vmatprep.subr.mxu0 0.0
        %1340 = vmatpush1.msra.mxu0 0.0
        %1341 = vmatprep.subr.mxu0 0.0
        %1342 = vmatpush1.msra.mxu0 0.0
        %1343 = vmatprep.subr.mxu0 0.0
        %1344 = vmatpush1.msra.mxu0 0.0
        %1345 = vmatprep.subr.mxu0 0.0
        %1346 = vmatpush1.msra.mxu0 0.0
        %1347 = vmatprep.subr.mxu0 0.0
        %1348 = vmatpush1.msra.mxu0 0.0
        %1349 = vmatprep.subr.mxu0 0.0
        %1350 = vmatpush1.msra.mxu0 0.0
        %1351 = vmatprep.mubr.f32.mxu0 0.0
        %v1352 = vand.u32 %v803, 4294901760
        %1353 = vmatmul.mubr.f32.gmra.mrb[0].mxu0 %v1352
        %v1354 = vpop.f32.mrb[0].mxu0
        %v1355 = vadd.f32 %v1236, %v1354
        %v1356 = vpop.f32.mrb[0].mxu0
        %1357 = vdwg.mxu0
        %1358 = vmatprep.subr.mxu0 0.0
        %v1359 = vand.u32 %v231, 4294901760
        %1360 = vmatpush1.msra.mxu0 %v1359
        %1361 = vmatprep.subr.mxu0 0.0
        %v1362 = vand.u32 %v232, 4294901760
        %1363 = vmatpush1.msra.mxu0 %v1362
        %1364 = vmatprep.subr.mxu0 0.0
        %v1365 = vand.u32 %v233, 4294901760
        %1366 = vmatpush1.msra.mxu0 %v1365
        %1367 = vmatprep.subr.mxu0 0.0
        %v1368 = vand.u32 %v234, 4294901760
        %1369 = vmatpush1.msra.mxu0 %v1368
        %1370 = vmatprep.subr.mxu0 0.0
        %v1371 = vand.u32 %v235, 4294901760
        %1372 = vmatpush1.msra.mxu0 %v1371
        %1373 = vmatprep.subr.mxu0 0.0
        %v1374 = vand.u32 %v236, 4294901760
        %1375 = vmatpush1.msra.mxu0 %v1374
        %1376 = vmatprep.subr.mxu0 0.0
        %v1377 = vand.u32 %v237, 4294901760
        %1378 = vmatpush1.msra.mxu0 %v1377
        %1379 = vmatprep.subr.mxu0 0.0
        %v1380 = vand.u32 %v238, 4294901760
        %1381 = vmatpush1.msra.mxu0 %v1380
        %1382 = vmatprep.subr.mxu0 0.0
        %v1383 = vand.u32 %v239, 4294901760
        %1384 = vmatpush1.msra.mxu0 %v1383
        %1385 = vmatprep.subr.mxu0 0.0
        %v1386 = vand.u32 %v240, 4294901760
        %1387 = vmatpush1.msra.mxu0 %v1386
        %1388 = vmatprep.subr.mxu0 0.0
        %v1389 = vand.u32 %v241, 4294901760
        %1390 = vmatpush1.msra.mxu0 %v1389
        %1391 = vmatprep.subr.mxu0 0.0
        %v1392 = vand.u32 %v242, 4294901760
        %1393 = vmatpush1.msra.mxu0 %v1392
        %1394 = vmatprep.subr.mxu0 0.0
        %v1395 = vand.u32 %v243, 4294901760
        %1396 = vmatpush1.msra.mxu0 %v1395
        %1397 = vmatprep.subr.mxu0 0.0
        %v1398 = vand.u32 %v244, 4294901760
        %1399 = vmatpush1.msra.mxu0 %v1398
        %1400 = vmatprep.subr.mxu0 0.0
        %v1401 = vand.u32 %v245, 4294901760
        %1402 = vmatpush1.msra.mxu0 %v1401
        %1403 = vmatprep.subr.mxu0 0.0
        %v1404 = vand.u32 %v246, 4294901760
        %1405 = vmatpush1.msra.mxu0 %v1404
        %1406 = vmatprep.subr.mxu0 0.0
        %1407 = vmatpush1.msra.mxu0 0.0
        %1408 = vmatprep.subr.mxu0 0.0
        %1409 = vmatpush1.msra.mxu0 0.0
        %1410 = vmatprep.subr.mxu0 0.0
        %1411 = vmatpush1.msra.mxu0 0.0
        %1412 = vmatprep.subr.mxu0 0.0
        %1413 = vmatpush1.msra.mxu0 0.0
        %1414 = vmatprep.subr.mxu0 0.0
        %1415 = vmatpush1.msra.mxu0 0.0
        %1416 = vmatprep.subr.mxu0 0.0
        %1417 = vmatpush1.msra.mxu0 0.0
        %1418 = vmatprep.subr.mxu0 0.0
        %1419 = vmatpush1.msra.mxu0 0.0
        %1420 = vmatprep.subr.mxu0 0.0
        %1421 = vmatpush1.msra.mxu0 0.0
        %1422 = vmatprep.subr.mxu0 0.0
        %1423 = vmatpush1.msra.mxu0 0.0
        %1424 = vmatprep.subr.mxu0 0.0
        %1425 = vmatpush1.msra.mxu0 0.0
        %1426 = vmatprep.subr.mxu0 0.0
        %1427 = vmatpush1.msra.mxu0 0.0
        %1428 = vmatprep.subr.mxu0 0.0
        %1429 = vmatpush1.msra.mxu0 0.0
        %1430 = vmatprep.subr.mxu0 0.0
        %1431 = vmatpush1.msra.mxu0 0.0
        %1432 = vmatprep.subr.mxu0 0.0
        %1433 = vmatpush1.msra.mxu0 0.0
        %1434 = vmatprep.subr.mxu0 0.0
        %1435 = vmatpush1.msra.mxu0 0.0
        %1436 = vmatprep.subr.mxu0 0.0
        %1437 = vmatpush1.msra.mxu0 0.0
        %1438 = vmatprep.mubr.f32.mxu0 0.0
        %v1439 = vand.u32 %v803, 4294901760
        %1440 = vmatmul.mubr.f32.gmra.mrb[0].mxu0 %v1439
        %v1441 = vpop.f32.mrb[0].mxu0
        %v1442 = vadd.f32 %v1355, %v1441
        %v1443 = vpop.f32.mrb[0].mxu0
        %1444 = vdwg.mxu0
        %v1445 = vsub.f32 %v288, %v1442
        %v1446 = vmul.f32 %v1445, %v1445
        %v1447 = vsel %vm257, %v1446, 0.0
        %1448 = vadd.xlane.f32.xlu0 %v1447
        %v1449 = vpop.xlane.xlu0 %1448
        %v1450 = vrot.slane %v1449, 4
        %v1451 = vadd.f32 %v1449, %v1450
        %v1452 = vrot.slane %v1451, 2
        %v1453 = vadd.f32 %v1451, %v1452
        %v1454 = vrot.slane %v1453, 1
        %v1455 = vadd.f32 %v1453, %v1454
        %s1456 = vtos %v1455
        %s1457 = sadd.f32 %s1456, 0.0
        %v1458 = vrot.slane %v803, 4
        %v1459 = vadd.f32 %v803, %v1458
        %v1460 = vrot.slane %v1459, 2
        %v1461 = vadd.f32 %v1459, %v1460
        %v1462 = vrot.slane %v1461, 1
        %v1463 = vadd.f32 %v1461, %v1462
        %v1464 = vadd.f32 %v1463, 0.0
        %s1465 = scalar_lea.vmem %s216, %s254 [#allocation2]
        %1466 = vst.msk [vmem:[%s1465] sm:$0xff] %vm257, %v1442
        %1467 = vst [vmem:[%s230] sm:$0x1] %v1464
        %v1468 = vstv %s1457
        %1469 = vst [vmem:[%s230 + $0x1] sm:$0x1] %v1468
        %s1470 = sand.u32 %s117, 1
        %s1471 = scalar_lea.sflag [#allocation3], %s1470
        %s1472 = sand.u32 %s117, 1
        %s1473 = smul.addr %s1472, 8
        %s1474 = scalar_lea.vmem [#allocation2], %s1473
        %p1475 = scmp.lt.s32.totalorder %s20, 1
        %s1476 = scalar_select %p1475, %s20, 1
        %s1477 = smul.addr %s1476, 2
        %s1478 = scalar_lea.vmem %s5, %s1477
        // Predicated region
        $region37: #{_vq_forward.1} parent=35 // pred_check
          %p1479 = pneg %p127
        $region38: #{_vq_forward.1} parent=35 // pred_check_branch
          %1481 = sbr.rel (%p1479) target = $region40
        $region39: #{_vq_forward.1} parent=35 // pred_region
          %s1483 = ssub.s32 128, 128
          %1484 = vsyncadd %s1471, %s1483
          %s1485 = smul.addr %s20, 128
          %s1486 = scalar_lea.hbm %s4, %s1485
          %s1488 = sshll.u32 %s1474, 4
          %s1489 = int_to_ptr.vmem [resolvable:$true] %s1488
          %1491 = dma.vmem_to_hbm [thread:$0]  %s1489, 128, %s1486, %s1471
        $region40: #{_vq_forward.1} parent=35 // pred_fallthru
          _
        // Predicated region
        $region41: #{_vq_forward.1} parent=35 // pred_check
          %p1492 = pneg %p153
        $region42: #{_vq_forward.1} parent=35 // pred_check_branch
          %1494 = sbr.rel (%p1492) target = $region44
        $region43: #{_vq_forward.1} parent=35 // pred_region
          _
        $region44: #{_vq_forward.1} parent=35 // pred_fallthru
          _
      $region36: #{_vq_forward.1} parent=5 // pred_fallthru
        _
      %p1495 = scmp.le.s32.totalorder 2, %s15
      // Predicated region
      $region45: #{_vq_forward.1} parent=5 // pred_check
        %p1496 = pneg %p1495
      $region46: #{_vq_forward.1} parent=5 // pred_check_branch
        %1498 = sbr.rel (%p1496) target = $region48
      $region47: #{_vq_forward.1} parent=5 // pred_region
        %s1499 = ssub.s32 %s15, 2
        // Predicated region
        $region49: #{_vq_forward.1} parent=47 // pred_check
          %p1500 = pneg %p133
        $region50: #{_vq_forward.1} parent=47 // pred_check_branch
          %1502 = sbr.rel (%p1500) target = $region52
        $region51: #{_vq_forward.1} parent=47 // pred_region
          %s1503 = sand.u32 %s118, 1
          %s1504 = scalar_lea.sflag [#allocation3], %s1503
          %s1505 = sand.u32 %s118, 1
          %s1506 = smul.addr %s1505, 8
          %s1507 = scalar_lea.vmem [#allocation2], %s1506
          %1508 = dma.done %s1504, 128
        $region52: #{_vq_forward.1} parent=47 // pred_fallthru
          _
        // Predicated region
        $region53: #{_vq_forward.1} parent=47 // pred_check
          %p1509 = pneg %p159
        $region54: #{_vq_forward.1} parent=47 // pred_check_branch
          %1511 = sbr.rel (%p1509) target = $region56
        $region55: #{_vq_forward.1} parent=47 // pred_region
          %p1512 = scmp.lt.s32.totalorder %s21, 1
          %s1513 = scalar_select %p1512, %s21, 1
          %s1514 = smul.addr %s1513, 2
          %s1515 = scalar_lea.vmem %s5, %s1514
        $region56: #{_vq_forward.1} parent=47 // pred_fallthru
          _
      $region48: #{_vq_forward.1} parent=5 // pred_fallthru
        _
    $region6: #{_vq_forward.1} parent=1 // loop_footer
      %s19 = sadd.s32 1, %s15
    $region7: #{_vq_forward.1} parent=1 // loop_footer_branch
      %14 = sbr.rel target = $region3
    $region8: #{_vq_forward.1} parent=1 // loop_exit
      _
    %1516 = vsyncpa [#allocation3], 1
    %s1517 = scalar_lea.sflag [#allocation3], 1
    %1518 = vsyncpa %s1517, 1

</llo_original>
